<compile_context>
chip_gen: v7x
topology: tpu7x:2x2x1
jax: 0.10.0
libtpu: 0.0.40
codegen_flags: <defaults>
</compile_context>

<pallas_src>
import math

import jax
import jax.numpy as jnp
from jax.experimental import pallas as pl
from jax.experimental.pallas import tpu as pltpu

# ---- model dims (from CVAEModel.__init__) ------------------------------------------------
LATENT = 256                 # latent_dim
VIS = 128                    # visual_encode_len / DepthEncoder c_dim
X_DIM = 14                   # x_dim (inter_params)
HID = 128                    # hidden_dim / hidden_dim1
OBS_H = OBS_W = 16           # small depth map for the demo
OBS_FLAT = OBS_H * OBS_W     # 256 (flattened depth input to the modeled DepthEncoder)
X_PAD = 16                   # inter_params padded 14 -> 16 lanes with zeros
ROT, PNT, FRC = 6, 3, 1      # decoder head widths
HEAD = ROT + PNT + FRC       # 10
HEAD_PAD = 128               # head block padded to a full 128-lane tile
OUT_W = 3 * LATENT + HEAD_PAD  # 896-lane dense output slab
ALIGN = 16                   # row alignment inside the bf16 weight slabs (bf16 tile = (16,128))

# ---- packed parameter slab layouts (static) ----------------------------------------------
# slab A: width 128.  (name, padded_row_count)
LAYOUT_A = [
    ("enc_w1", OBS_FLAT),   # (256,128)  DepthEncoder fc1
    ("enc_b1", ALIGN),
    ("enc_w2", VIS),        # (128,128)  DepthEncoder fc2
    ("enc_b2", ALIGN),
    ("post_w_obs", VIS),    # (128,128)  LatentEncode fc1, rows for obs_encode
    ("post_w_x", X_PAD),    # (14,128)   LatentEncode fc1, rows for inter_params (zero-padded)
    ("post_b1", ALIGN),
    ("dec_w_obs", VIS),     # (128,128)  TestDecoder fc1, rows for obs_encode
    ("dec_w_z", LATENT),    # (256,128)  TestDecoder fc1, rows for z
    ("dec_b1", ALIGN),
    ("dec_w2", HID),        # (128,128)  TestDecoder fc2
    ("dec_b2", ALIGN),
    ("head_w", HID),        # (128,10 -> 128)  fused rot|point|force heads, zero-padded lanes
    ("head_b", ALIGN),
]
# slab B: width 512 (fused mean|logvar head of the posterior).
LAYOUT_B = [
    ("post_w_mv", HID),     # (128, 512)
    ("post_b_mv", ALIGN),
]


def _offsets(layout):
    offs, o = {}, 0
    for name, rows in layout:
        offs[name] = o
        o += rows
    return offs, o


OFF_A, ROWS_A = _offsets(LAYOUT_A)
OFF_B, ROWS_B = _offsets(LAYOUT_B)
WIDTH_A = 128
WIDTH_B = 2 * LATENT  # 512


# ---- kernel -------------------------------------------------------------------------------
def cvae_kernel(obs_ref, x_ref, eps_ref, wa_ref, wb_ref, out_ref):
    f32 = jnp.float32
    bf16 = jnp.bfloat16

    def W(name, rows):                       # static, 16-row-aligned slab slice
        o = OFF_A[name]
        return wa_ref[o:o + rows, :]

    def Bias(name):                          # (1, 128) bias row
        o = OFF_A[name]
        return wa_ref[o:o + 1, :].astype(f32)

    def mm(x, w):                            # bf16 MXU matmul, f32 accumulation
        return jnp.dot(x.astype(bf16), w, preferred_element_type=f32)

    def lrelu(x):                            # LeakyReLU(0.1)
        return jnp.maximum(x, 0.1 * x)

    obs = obs_ref[...]                       # (bb, 256) f32
    x = x_ref[...]                           # (bb, 16)  f32 (lanes 14,15 are zero)
    eps = eps_ref[...]                       # (bb, 256) f32

    # DepthEncoder (modeled, see TODO above)
    h = lrelu(mm(obs, W("enc_w1", OBS_FLAT)) + Bias("enc_b1"))
    obs_enc = lrelu(mm(h, W("enc_w2", VIS)) + Bias("enc_b2"))        # (bb, 128)

    # LatentEncode on cat([obs_encode, inter_params]) via split matmul
    hp = lrelu(mm(obs_enc, W("post_w_obs", VIS))
               + mm(x, W("post_w_x", X_PAD))
               + Bias("post_b1"))                                    # (bb, 128)
    ow = OFF_B["post_w_mv"]
    ob = OFF_B["post_b_mv"]
    mv = (jnp.dot(hp.astype(bf16), wb_ref[ow:ow + HID, :],
                  preferred_element_type=f32)
          + wb_ref[ob:ob + 1, :].astype(f32))                        # (bb, 512) = [mean|logvar]
    z_mean = mv[:, :LATENT]
    z_log_var = mv[:, LATENT:]

    # reparameterize (training path; eps supplied externally)
    z = z_mean + eps * jnp.exp(0.5 * z_log_var)                      # (bb, 256)

    # TestDecoder on cat([obs_encode, z]) via split matmul
    hd = lrelu(mm(obs_enc, W("dec_w_obs", VIS))
               + mm(z, W("dec_w_z", LATENT))
               + Bias("dec_b1"))
    hd = lrelu(mm(hd, W("dec_w2", HID)) + Bias("dec_b2"))
    heads = mm(hd, W("head_w", HID)) + Bias("head_b")                # (bb, 128): [rot|pnt|frc|0..]

    # KL, reduced per row (mean over the 256 latent dims); wrapper averages over batch
    kl = -0.5 * (1.0 + z_log_var - z_mean * z_mean - jnp.exp(z_log_var))
    kl_row = jnp.mean(kl, axis=1, keepdims=True)                     # (bb, 1)

    # single lane-dense output slab
    out_ref[:, 0:LATENT] = z_mean
    out_ref[:, LATENT:2 * LATENT] = z_log_var
    out_ref[:, 2 * LATENT:3 * LATENT] = z
    out_ref[:, 3 * LATENT:OUT_W] = heads
    out_ref[:, 3 * LATENT + HEAD:3 * LATENT + HEAD + 1] = kl_row


# ---- parameters ---------------------------------------------------------------------------
def init_params(key):
    """PyTorch-Linear-style init; weights stored (in, out); values snapped to bf16 grid."""
    rt = lambda a: a.astype(jnp.bfloat16).astype(jnp.float32)

    def lin(k, fin, fout):
        kw, kb = jax.random.split(k)
        bound = 1.0 / math.sqrt(fin)
        w = jax.random.uniform(kw, (fin, fout), jnp.float32, -bound, bound)
        b = jax.random.uniform(kb, (1, fout), jnp.float32, -bound, bound)
        return rt(w), rt(b)

    ks = jax.random.split(key, 8)
    enc_w1, enc_b1 = lin(ks[0], OBS_FLAT, VIS)
    enc_w2, enc_b2 = lin(ks[1], VIS, VIS)
    post_w1, post_b1 = lin(ks[2], VIS + X_DIM, HID)       # Linear(142, 128)
    mean_w, mean_b = lin(ks[3], HID, LATENT)
    lv_w, lv_b = lin(ks[4], HID, LATENT)
    dec_w1, dec_b1 = lin(ks[5], VIS + LATENT, HID)        # Linear(384, 128)
    dec_w2, dec_b2 = lin(ks[6], HID, HID)
    kr, kp, kf = jax.random.split(ks[7], 3)
    rot_w, rot_b = lin(kr, HID, ROT)
    pnt_w, pnt_b = lin(kp, HID, PNT)
    frc_w, frc_b = lin(kf, HID, FRC)

    return {
        "enc_w1": enc_w1, "enc_b1": enc_b1,
        "enc_w2": enc_w2, "enc_b2": enc_b2,
        "post_w_obs": post_w1[:VIS], "post_w_x": post_w1[VIS:], "post_b1": post_b1,
        "post_w_mv": jnp.concatenate([mean_w, lv_w], axis=1),
        "post_b_mv": jnp.concatenate([mean_b, lv_b], axis=1),
        "dec_w_obs": dec_w1[:VIS], "dec_w_z": dec_w1[VIS:], "dec_b1": dec_b1,
        "dec_w2": dec_w2, "dec_b2": dec_b2,
        "head_w": jnp.concatenate([rot_w, pnt_w, frc_w], axis=1),
        "head_b": jnp.concatenate([rot_b, pnt_b, frc_b], axis=1),
    }


def pack_params(p, dtype=jnp.bfloat16):
    """Pack all parameters into two contiguous bf16 slabs (one HBM->VMEM DMA each)."""
    def pack(layout, offs, rows, width):
        slab = jnp.zeros((rows, width), jnp.float32)
        for name, _ in layout:
            a = p[name]
            slab = slab.at[offs[name]:offs[name] + a.shape[0], :a.shape[1]].set(a)
        return slab.astype(dtype)

    slab_a = pack(LAYOUT_A, OFF_A, ROWS_A, WIDTH_A)
    slab_b = pack(LAYOUT_B, OFF_B, ROWS_B, WIDTH_B)
    return slab_a, slab_b


# ---- host wrapper -------------------------------------------------------------------------
def cvae_forward(inter_params, obs, eps, slab_a, slab_b, *, block_b=128):
    B = obs.shape[0]
    obs2 = obs.reshape(B, OBS_FLAT).astype(jnp.float32)
    x = jnp.pad(inter_params.astype(jnp.float32), ((0, 0), (0, X_PAD - X_DIM)))
    eps = eps.astype(jnp.float32)

    bb = min(block_b, B)
    assert B % bb == 0 and bb % 8 == 0, "batch must be a multiple of the (>=8) batch block"
    grid = (B // bb,)

    out = pl.pallas_call(
        cvae_kernel,
        out_shape=jax.ShapeDtypeStruct((B, OUT_W), jnp.float32),
        grid_spec=pltpu.PrefetchScalarGridSpec(
            num_scalar_prefetch=0,
            grid=grid,
            in_specs=[
                pl.BlockSpec((bb, OBS_FLAT), lambda i: (i, 0)),       # obs tiles
                pl.BlockSpec((bb, X_PAD), lambda i: (i, 0)),          # inter_params tiles
                pl.BlockSpec((bb, LATENT), lambda i: (i, 0)),         # eps tiles
                pl.BlockSpec((ROWS_A, WIDTH_A), lambda i: (0, 0)),    # weight slab A (resident)
                pl.BlockSpec((ROWS_B, WIDTH_B), lambda i: (0, 0)),    # weight slab B (resident)
            ],
            out_specs=pl.BlockSpec((bb, OUT_W), lambda i: (i, 0)),
        ),
        compiler_params=pltpu.CompilerParams(dimension_semantics=("parallel",)),
    )(obs2, x, eps, slab_a, slab_b)

    z_mean = out[:, 0:LATENT]
    z_log_var = out[:, LATENT:2 * LATENT]
    z = out[:, 2 * LATENT:3 * LATENT]
    base = 3 * LATENT
    recon_rotations = out[:, base:base + ROT]
    recon_point = out[:, base + ROT:base + ROT + PNT]
    recon_force = out[:, base + ROT + PNT:base + HEAD]
    kl_loss_z = jnp.mean(out[:, base + HEAD])   # mean of per-row means == global mean
    return kl_loss_z, (z_mean, z_log_var), (recon_rotations, recon_point, recon_force), z


# ---- pure-JAX reference (f32) -------------------------------------------------------------
def cvae_forward_ref(inter_params, obs, eps, p):
    lrelu = lambda a: jnp.maximum(a, 0.1 * a)
    B = obs.shape[0]
    o = obs.reshape(B, OBS_FLAT)
    h = lrelu(o @ p["enc_w1"] + p["enc_b1"])
    obs_enc = lrelu(h @ p["enc_w2"] + p["enc_b2"])
    hp = lrelu(obs_enc @ p["post_w_obs"] + inter_params @ p["post_w_x"] + p["post_b1"])
    mv = hp @ p["post_w_mv"] + p["post_b_mv"]
    z_mean, z_log_var = mv[:, :LATENT], mv[:, LATENT:]
    z = z_mean + eps * jnp.exp(0.5 * z_log_var)
    hd = lrelu(obs_enc @ p["dec_w_obs"] + z @ p["dec_w_z"] + p["dec_b1"])
    hd = lrelu(hd @ p["dec_w2"] + p["dec_b2"])
    heads = hd @ p["head_w"] + p["head_b"]
    rot, pnt, frc = heads[:, :ROT], heads[:, ROT:ROT + PNT], heads[:, ROT + PNT:HEAD]
    kl = jnp.mean(-0.5 * (1.0 + z_log_var - z_mean ** 2 - jnp.exp(z_log_var)))
    return kl, (z_mean, z_log_var), (rot, pnt, frc), z


if __name__ == "__main__":
    root = jax.random.PRNGKey(0)
    k_par, k_obs, k_x, k_eps = jax.random.split(root, 4)

    B = 64          # small demo batch; production would use >=128 rows per tile
    BLOCK_B = 32    # exercises the batch grid (grid=(2,))

    obs = jax.random.normal(k_obs, (B, 1, OBS_H, OBS_W), jnp.float32)   # depth map
    inter_params = jax.random.normal(k_x, (B, X_DIM), jnp.float32)
    eps = jax.random.normal(k_eps, (B, LATENT), jnp.float32)            # reparam. noise

    params = init_params(k_par)
    slab_a, slab_b = pack_params(params)

    kl, (zm, zlv), (rot, pnt, frc), z = jax.block_until_ready(
        cvae_forward(inter_params, obs, eps, slab_a, slab_b, block_b=BLOCK_B))

    # shapes
    assert zm.shape == (B, LATENT) and zlv.shape == (B, LATENT) and z.shape == (B, LATENT)
    assert rot.shape == (B, ROT) and pnt.shape == (B, PNT) and frc.shape == (B, FRC)
    assert kl.shape == ()

    # correctness vs pure-JAX f32 reference (bf16 matmul operands -> loose tolerance)
    rkl, (rzm, rzlv), (rrot, rpnt, rfrc), rz = cvae_forward_ref(inter_params, obs, eps, params)
    for a, b in ((kl, rkl), (zm, rzm), (zlv, rzlv), (rot, rrot),
                 (pnt, rpnt), (frc, rfrc), (z, rz)):
        assert bool(jnp.all(jnp.isfinite(a)))
        assert bool(jnp.allclose(a, b, rtol=5e-2, atol=5e-2)), float(jnp.max(jnp.abs(a - b)))

    print("KERNEL_OK")
</pallas_src>

<mosaic_0001>
module attributes {stable_mosaic.version = 11 : i64} {
  func.func @cvae_kernel(%arg0: i32, %arg1: memref<32x256xf32, #tpu.memory_space<vmem>>, %arg2: memref<32x16xf32, #tpu.memory_space<vmem>>, %arg3: memref<32x256xf32, #tpu.memory_space<vmem>>, %arg4: memref<1264x128xbf16, #tpu.memory_space<vmem>>, %arg5: memref<144x512xbf16, #tpu.memory_space<vmem>>, %arg6: memref<32x896xf32, #tpu.memory_space<vmem>>) attributes {dimension_semantics = [#tpu.dimension_semantics<parallel>], iteration_bounds = array<i64: 2>, scalar_prefetch = 0 : i64, scratch_operands = 0 : i64, tpu.core_type = #tpu.core_type<tc>, window_params = [{transform_indices = @transform_0, window_bounds = array<i64: 32, 256>}, {transform_indices = @transform_1, window_bounds = array<i64: 32, 16>}, {transform_indices = @transform_2, window_bounds = array<i64: 32, 256>}, {pipeline_mode = #tpu.pipeline_mode<synchronous>, transform_indices = @transform_3, window_bounds = array<i64: 1264, 128>}, {pipeline_mode = #tpu.pipeline_mode<synchronous>, transform_indices = @transform_4, window_bounds = array<i64: 144, 512>}, {transform_indices = @transform_5, window_bounds = array<i64: 32, 896>}]} {
    %c0 = arith.constant 0 : index
    %c0_0 = arith.constant 0 : index
    %0 = vector.load %arg1[%c0, %c0_0] : memref<32x256xf32, #tpu.memory_space<vmem>>, vector<32x256xf32>
    %c0_1 = arith.constant 0 : index
    %c0_2 = arith.constant 0 : index
    %1 = vector.load %arg2[%c0_1, %c0_2] : memref<32x16xf32, #tpu.memory_space<vmem>>, vector<32x16xf32>
    %c0_3 = arith.constant 0 : index
    %c0_4 = arith.constant 0 : index
    %2 = vector.load %arg3[%c0_3, %c0_4] : memref<32x256xf32, #tpu.memory_space<vmem>>, vector<32x256xf32>
    %c0_5 = arith.constant 0 : index
    %c0_6 = arith.constant 0 : index
    %3 = vector.load %arg4[%c0_5, %c0_6] : memref<1264x128xbf16, #tpu.memory_space<vmem>>, vector<256x128xbf16>
    %4 = arith.truncf %0 : vector<32x256xf32> to vector<32x256xbf16>
    %cst = arith.constant dense<0.000000e+00> : vector<32x128xf32>
    %5 = tpu.matmul %4, %3, %cst {dimension_numbers = #tpu.dot_dimension_numbers<[1], [0], [0], [1], [0, 0, 1, 1], [], []>} : vector<32x256xbf16>, vector<256x128xbf16>, vector<32x128xf32> -> vector<32x128xf32>
    %c256 = arith.constant 256 : index
    %c0_7 = arith.constant 0 : index
    %6 = vector.load %arg4[%c256, %c0_7] : memref<1264x128xbf16, #tpu.memory_space<vmem>>, vector<1x128xbf16>
    %7 = arith.extf %6 : vector<1x128xbf16> to vector<1x128xf32>
    %8 = vector.broadcast %7 : vector<1x128xf32> to vector<32x128xf32>
    %9 = arith.addf %5, %8 : vector<32x128xf32>
    %cst_8 = arith.constant 1.000000e-01 : f32
    %10 = vector.broadcast %cst_8 : f32 to vector<32x128xf32>
    %11 = arith.mulf %10, %9 : vector<32x128xf32>
    %12 = arith.maximumf %9, %11 : vector<32x128xf32>
    %c272 = arith.constant 272 : index
    %c0_9 = arith.constant 0 : index
    %13 = vector.load %arg4[%c272, %c0_9] : memref<1264x128xbf16, #tpu.memory_space<vmem>>, vector<128x128xbf16>
    %14 = arith.truncf %12 : vector<32x128xf32> to vector<32x128xbf16>
    %cst_10 = arith.constant dense<0.000000e+00> : vector<32x128xf32>
    %15 = tpu.matmul %14, %13, %cst_10 {dimension_numbers = #tpu.dot_dimension_numbers<[1], [0], [0], [1], [0, 0, 1, 1], [], []>} : vector<32x128xbf16>, vector<128x128xbf16>, vector<32x128xf32> -> vector<32x128xf32>
    %c400 = arith.constant 400 : index
    %c0_11 = arith.constant 0 : index
    %16 = vector.load %arg4[%c400, %c0_11] : memref<1264x128xbf16, #tpu.memory_space<vmem>>, vector<1x128xbf16>
    %17 = arith.extf %16 : vector<1x128xbf16> to vector<1x128xf32>
    %18 = vector.broadcast %17 : vector<1x128xf32> to vector<32x128xf32>
    %19 = arith.addf %15, %18 : vector<32x128xf32>
    %cst_12 = arith.constant 1.000000e-01 : f32
    %20 = vector.broadcast %cst_12 : f32 to vector<32x128xf32>
    %21 = arith.mulf %20, %19 : vector<32x128xf32>
    %22 = arith.maximumf %19, %21 : vector<32x128xf32>
    %c416 = arith.constant 416 : index
    %c0_13 = arith.constant 0 : index
    %23 = vector.load %arg4[%c416, %c0_13] : memref<1264x128xbf16, #tpu.memory_space<vmem>>, vector<128x128xbf16>
    %24 = arith.truncf %22 : vector<32x128xf32> to vector<32x128xbf16>
    %cst_14 = arith.constant dense<0.000000e+00> : vector<32x128xf32>
    %25 = tpu.matmul %24, %23, %cst_14 {dimension_numbers = #tpu.dot_dimension_numbers<[1], [0], [0], [1], [0, 0, 1, 1], [], []>} : vector<32x128xbf16>, vector<128x128xbf16>, vector<32x128xf32> -> vector<32x128xf32>
    %c544 = arith.constant 544 : index
    %c0_15 = arith.constant 0 : index
    %26 = vector.load %arg4[%c544, %c0_15] : memref<1264x128xbf16, #tpu.memory_space<vmem>>, vector<16x128xbf16>
    %27 = arith.truncf %1 : vector<32x16xf32> to vector<32x16xbf16>
    %cst_16 = arith.constant dense<0.000000e+00> : vector<32x128xf32>
    %28 = tpu.matmul %27, %26, %cst_16 {dimension_numbers = #tpu.dot_dimension_numbers<[1], [0], [0], [1], [0, 0, 1, 1], [], []>} : vector<32x16xbf16>, vector<16x128xbf16>, vector<32x128xf32> -> vector<32x128xf32>
    %29 = arith.addf %25, %28 : vector<32x128xf32>
    %c560 = arith.constant 560 : index
    %c0_17 = arith.constant 0 : index
    %30 = vector.load %arg4[%c560, %c0_17] : memref<1264x128xbf16, #tpu.memory_space<vmem>>, vector<1x128xbf16>
    %31 = arith.extf %30 : vector<1x128xbf16> to vector<1x128xf32>
    %32 = vector.broadcast %31 : vector<1x128xf32> to vector<32x128xf32>
    %33 = arith.addf %29, %32 : vector<32x128xf32>
    %cst_18 = arith.constant 1.000000e-01 : f32
    %34 = vector.broadcast %cst_18 : f32 to vector<32x128xf32>
    %35 = arith.mulf %34, %33 : vector<32x128xf32>
    %36 = arith.maximumf %33, %35 : vector<32x128xf32>
    %37 = arith.truncf %36 : vector<32x128xf32> to vector<32x128xbf16>
    %c0_19 = arith.constant 0 : index
    %c0_20 = arith.constant 0 : index
    %38 = vector.load %arg5[%c0_19, %c0_20] : memref<144x512xbf16, #tpu.memory_space<vmem>>, vector<128x512xbf16>
    %cst_21 = arith.constant dense<0.000000e+00> : vector<32x512xf32>
    %39 = tpu.matmul %37, %38, %cst_21 {dimension_numbers = #tpu.dot_dimension_numbers<[1], [0], [0], [1], [0, 0, 1, 1], [], []>} : vector<32x128xbf16>, vector<128x512xbf16>, vector<32x512xf32> -> vector<32x512xf32>
    %c128 = arith.constant 128 : index
    %c0_22 = arith.constant 0 : index
    %40 = vector.load %arg5[%c128, %c0_22] : memref<144x512xbf16, #tpu.memory_space<vmem>>, vector<1x512xbf16>
    %41 = arith.extf %40 : vector<1x512xbf16> to vector<1x512xf32>
    %42 = vector.broadcast %41 : vector<1x512xf32> to vector<32x512xf32>
    %43 = arith.addf %39, %42 : vector<32x512xf32>
    %44 = vector.extract_strided_slice %43 {offsets = [0, 0], sizes = [32, 256], strides = [1, 1]} : vector<32x512xf32> to vector<32x256xf32>
    %45 = vector.extract_strided_slice %43 {offsets = [0, 256], sizes = [32, 256], strides = [1, 1]} : vector<32x512xf32> to vector<32x256xf32>
    %cst_23 = arith.constant 5.000000e-01 : f32
    %46 = vector.broadcast %cst_23 : f32 to vector<32x256xf32>
    %47 = arith.mulf %46, %45 : vector<32x256xf32>
    %48 = math.exp %47 : vector<32x256xf32>
    %49 = arith.mulf %2, %48 : vector<32x256xf32>
    %50 = arith.addf %44, %49 : vector<32x256xf32>
    %c576 = arith.constant 576 : index
    %c0_24 = arith.constant 0 : index
    %51 = vector.load %arg4[%c576, %c0_24] : memref<1264x128xbf16, #tpu.memory_space<vmem>>, vector<128x128xbf16>
    %52 = arith.truncf %22 : vector<32x128xf32> to vector<32x128xbf16>
    %cst_25 = arith.constant dense<0.000000e+00> : vector<32x128xf32>
    %53 = tpu.matmul %52, %51, %cst_25 {dimension_numbers = #tpu.dot_dimension_numbers<[1], [0], [0], [1], [0, 0, 1, 1], [], []>} : vector<32x128xbf16>, vector<128x128xbf16>, vector<32x128xf32> -> vector<32x128xf32>
    %c704 = arith.constant 704 : index
    %c0_26 = arith.constant 0 : index
    %54 = vector.load %arg4[%c704, %c0_26] : memref<1264x128xbf16, #tpu.memory_space<vmem>>, vector<256x128xbf16>
    %55 = arith.truncf %50 : vector<32x256xf32> to vector<32x256xbf16>
    %cst_27 = arith.constant dense<0.000000e+00> : vector<32x128xf32>
    %56 = tpu.matmul %55, %54, %cst_27 {dimension_numbers = #tpu.dot_dimension_numbers<[1], [0], [0], [1], [0, 0, 1, 1], [], []>} : vector<32x256xbf16>, vector<256x128xbf16>, vector<32x128xf32> -> vector<32x128xf32>
    %57 = arith.addf %53, %56 : vector<32x128xf32>
    %c960 = arith.constant 960 : index
    %c0_28 = arith.constant 0 : index
    %58 = vector.load %arg4[%c960, %c0_28] : memref<1264x128xbf16, #tpu.memory_space<vmem>>, vector<1x128xbf16>
    %59 = arith.extf %58 : vector<1x128xbf16> to vector<1x128xf32>
    %60 = vector.broadcast %59 : vector<1x128xf32> to vector<32x128xf32>
    %61 = arith.addf %57, %60 : vector<32x128xf32>
    %cst_29 = arith.constant 1.000000e-01 : f32
    %62 = vector.broadcast %cst_29 : f32 to vector<32x128xf32>
    %63 = arith.mulf %62, %61 : vector<32x128xf32>
    %64 = arith.maximumf %61, %63 : vector<32x128xf32>
    %c976 = arith.constant 976 : index
    %c0_30 = arith.constant 0 : index
    %65 = vector.load %arg4[%c976, %c0_30] : memref<1264x128xbf16, #tpu.memory_space<vmem>>, vector<128x128xbf16>
    %66 = arith.truncf %64 : vector<32x128xf32> to vector<32x128xbf16>
    %cst_31 = arith.constant dense<0.000000e+00> : vector<32x128xf32>
    %67 = tpu.matmul %66, %65, %cst_31 {dimension_numbers = #tpu.dot_dimension_numbers<[1], [0], [0], [1], [0, 0, 1, 1], [], []>} : vector<32x128xbf16>, vector<128x128xbf16>, vector<32x128xf32> -> vector<32x128xf32>
    %c1104 = arith.constant 1104 : index
    %c0_32 = arith.constant 0 : index
    %68 = vector.load %arg4[%c1104, %c0_32] : memref<1264x128xbf16, #tpu.memory_space<vmem>>, vector<1x128xbf16>
    %69 = arith.extf %68 : vector<1x128xbf16> to vector<1x128xf32>
    %70 = vector.broadcast %69 : vector<1x128xf32> to vector<32x128xf32>
    %71 = arith.addf %67, %70 : vector<32x128xf32>
    %cst_33 = arith.constant 1.000000e-01 : f32
    %72 = vector.broadcast %cst_33 : f32 to vector<32x128xf32>
    %73 = arith.mulf %72, %71 : vector<32x128xf32>
    %74 = arith.maximumf %71, %73 : vector<32x128xf32>
    %c1120 = arith.constant 1120 : index
    %c0_34 = arith.constant 0 : index
    %75 = vector.load %arg4[%c1120, %c0_34] : memref<1264x128xbf16, #tpu.memory_space<vmem>>, vector<128x128xbf16>
    %76 = arith.truncf %74 : vector<32x128xf32> to vector<32x128xbf16>
    %cst_35 = arith.constant dense<0.000000e+00> : vector<32x128xf32>
    %77 = tpu.matmul %76, %75, %cst_35 {dimension_numbers = #tpu.dot_dimension_numbers<[1], [0], [0], [1], [0, 0, 1, 1], [], []>} : vector<32x128xbf16>, vector<128x128xbf16>, vector<32x128xf32> -> vector<32x128xf32>
    %c1248 = arith.constant 1248 : index
    %c0_36 = arith.constant 0 : index
    %78 = vector.load %arg4[%c1248, %c0_36] : memref<1264x128xbf16, #tpu.memory_space<vmem>>, vector<1x128xbf16>
    %79 = arith.extf %78 : vector<1x128xbf16> to vector<1x128xf32>
    %80 = vector.broadcast %79 : vector<1x128xf32> to vector<32x128xf32>
    %81 = arith.addf %77, %80 : vector<32x128xf32>
    %cst_37 = arith.constant 1.000000e+00 : f32
    %82 = vector.broadcast %cst_37 : f32 to vector<32x256xf32>
    %83 = arith.addf %82, %45 : vector<32x256xf32>
    %84 = arith.mulf %44, %44 : vector<32x256xf32>
    %85 = arith.subf %83, %84 : vector<32x256xf32>
    %86 = math.exp %45 : vector<32x256xf32>
    %87 = arith.subf %85, %86 : vector<32x256xf32>
    %cst_38 = arith.constant -5.000000e-01 : f32
    %88 = vector.broadcast %cst_38 : f32 to vector<32x256xf32>
    %89 = arith.mulf %88, %87 : vector<32x256xf32>
    %cst_39 = arith.constant dense<0.000000e+00> : vector<32xf32>
    %90 = vector.multi_reduction <add>, %89, %cst_39 [1] : vector<32x256xf32> to vector<32xf32>
    %91 = vector.shape_cast %90 : vector<32xf32> to vector<32x1xf32>
    %cst_40 = arith.constant 2.560000e+02 : f32
    %92 = vector.broadcast %cst_40 : f32 to vector<32x1xf32>
    %93 = arith.divf %91, %92 : vector<32x1xf32>
    %c0_41 = arith.constant 0 : index
    %c0_42 = arith.constant 0 : index
    %94 = vector.load %arg6[%c0_41, %c0_42] : memref<32x896xf32, #tpu.memory_space<vmem>>, vector<32x256xf32>
    tpu.vector_store %arg6[%c0_41, %c0_42], %44 {strides = array<i32>} : memref<32x896xf32, #tpu.memory_space<vmem>>, vector<32x256xf32>,
    %c0_43 = arith.constant 0 : index
    %c256_44 = arith.constant 256 : index
    %95 = vector.load %arg6[%c0_43, %c256_44] : memref<32x896xf32, #tpu.memory_space<vmem>>, vector<32x256xf32>
    tpu.vector_store %arg6[%c0_43, %c256_44], %45 {strides = array<i32>} : memref<32x896xf32, #tpu.memory_space<vmem>>, vector<32x256xf32>,
    %c0_45 = arith.constant 0 : index
    %c512 = arith.constant 512 : index
    %96 = vector.load %arg6[%c0_45, %c512] : memref<32x896xf32, #tpu.memory_space<vmem>>, vector<32x256xf32>
    tpu.vector_store %arg6[%c0_45, %c512], %50 {strides = array<i32>} : memref<32x896xf32, #tpu.memory_space<vmem>>, vector<32x256xf32>,
    %c0_46 = arith.constant 0 : index
    %c768 = arith.constant 768 : index
    %97 = vector.load %arg6[%c0_46, %c768] : memref<32x896xf32, #tpu.memory_space<vmem>>, vector<32x128xf32>
    tpu.vector_store %arg6[%c0_46, %c768], %81 {strides = array<i32>} : memref<32x896xf32, #tpu.memory_space<vmem>>, vector<32x128xf32>,
    %c0_47 = arith.constant 0 : index
    %c778 = arith.constant 778 : index
    %98 = vector.load %arg6[%c0_47, %c778] : memref<32x896xf32, #tpu.memory_space<vmem>>, vector<32x1xf32>
    tpu.vector_store %arg6[%c0_47, %c778], %93 {strides = array<i32>} : memref<32x896xf32, #tpu.memory_space<vmem>>, vector<32x1xf32>,
    return
  }
  func.func @transform_0(%arg0: i32) -> (i32, i32) {
    %c0_i32 = arith.constant 0 : i32
    %c0_i32_0 = arith.constant 0 : i32
    return %arg0, %c0_i32 : i32, i32
  }
  func.func @transform_1(%arg0: i32) -> (i32, i32) {
    %c0_i32 = arith.constant 0 : i32
    %c0_i32_0 = arith.constant 0 : i32
    return %arg0, %c0_i32 : i32, i32
  }
  func.func @transform_2(%arg0: i32) -> (i32, i32) {
    %c0_i32 = arith.constant 0 : i32
    %c0_i32_0 = arith.constant 0 : i32
    return %arg0, %c0_i32 : i32, i32
  }
  func.func @transform_3(%arg0: i32) -> (i32, i32) {
    %c0_i32 = arith.constant 0 : i32
    %c0_i32_0 = arith.constant 0 : i32
    %c0_i32_1 = arith.constant 0 : i32
    return %c0_i32, %c0_i32_0 : i32, i32
  }
  func.func @transform_4(%arg0: i32) -> (i32, i32) {
    %c0_i32 = arith.constant 0 : i32
    %c0_i32_0 = arith.constant 0 : i32
    %c0_i32_1 = arith.constant 0 : i32
    return %c0_i32, %c0_i32_0 : i32, i32
  }
  func.func @transform_5(%arg0: i32) -> (i32, i32) {
    %c0_i32 = arith.constant 0 : i32
    %c0_i32_0 = arith.constant 0 : i32
    return %arg0, %c0_i32 : i32, i32
  }
}

</mosaic_0001>

<llo_original>
// kernel: tpu_custom_call.1
$region0: #{tpu_custom_call.1}
  #allocation0 [shape = 'u32[]', space=smem, size = 0x4, offset = 0x4, fixed_abs, tag = 'smem constant byte address 0x4 - core index']
  #allocation1 [shape = 'u32[144,128]{1,0:T(1,128)}', space=vmem, size = 0x12000, scoped, tag = 'internal scratch']
  %s0 = inlined_call_operand.hbm [shape: f32[64,256], index: 0, kind: input, shape index: {}]
  %s1 = inlined_call_operand.vmem [shape: f32[64,16], index: 1, kind: input, shape index: {}]
  %s2 = inlined_call_operand.hbm [shape: f32[64,256], index: 2, kind: input, shape index: {}]
  %s3 = inlined_call_operand.hbm [shape: bf16[1264,128], index: 3, kind: input, shape index: {}]
  %s4 = inlined_call_operand.hbm [shape: bf16[144,512], index: 4, kind: input, shape index: {}]
  %s5 = inlined_call_operand.hbm [shape: f32[64,896], index: 5, kind: output, shape index: {}]
  %s6 = sld [smem:[#allocation0]]
  $region69: #{tpu_custom_call.1} parent=0
    _
  %s8 = ssub.s32 1, %s6
  %s9 = scalar_select 0, %s8, %s6
  $region1: #{tpu_custom_call.1} parent=0
    #allocation2 [shape = 'u8[65536]{0}', space=vmem, size = 0x10000, scoped, tag = 'input window, operand 0']
    #allocation3 [shape = 's32[2]{0}', space=sflag, size = 0x8, scoped, tag = 'scoped memory for tpu_custom_call.1']
    #allocation4 [shape = 's32[2]{0}', space=sflag, size = 0x8, scoped, tag = 'scoped memory for tpu_custom_call.1']
    #allocation5 [shape = 'u8[65536]{0}', space=vmem, size = 0x10000, scoped, tag = 'input window, operand 2']
    #allocation6 [shape = 's32[2]{0}', space=sflag, size = 0x8, scoped, tag = 'scoped memory for tpu_custom_call.1']
    #allocation7 [shape = 'u8[323584]{0}', space=vmem, size = 0x4f000, scoped, tag = 'input window, operand 3, single buffered']
    #allocation8 [shape = 'u8[147456]{0}', space=vmem, size = 0x24000, scoped, tag = 'input window, operand 4, single buffered']
    #allocation9 [shape = 's32[1]{0}', space=sflag, size = 0x4, scoped, tag = 'scoped memory for tpu_custom_call.1']
    #allocation10 [shape = 'u8[229376]{0}', space=vmem, size = 0x38000, scoped, tag = 'output window, operand 0']
    %10 = vsyncpa [#allocation3], 0
    %s11 = scalar_lea.sflag [#allocation3], 1
    %12 = vsyncpa %s11, 0
    %13 = vsyncpa [#allocation6], 0
    %s14 = scalar_lea.sflag [#allocation6], 1
    %15 = vsyncpa %s14, 0
    %16 = vsyncpa [#allocation9], 0
    %17 = vsyncpa [#allocation4], 0
    %s18 = scalar_lea.sflag [#allocation4], 1
    %19 = vsyncpa %s18, 0
    loop: start=0, step=1, limit=4
    $region2: #{tpu_custom_call.1} parent=1 // loop_pre_header
      _
    $region3: #{tpu_custom_call.1} parent=1 // loop_header
      %s21 = sphi 0, %s25
      %p22 = scmp.ge.s32.totalorder %s21, 4
      %s31 = sphi 0, %s33
      %s34 = sphi 0, %s31
      %s35 = sphi 0, %s34
      %s51 = sphi 0, %s35
      %s57 = sphi 0, %s59
      %s60 = sphi 0, %s57
      %s61 = sphi 0, %s60
      %s77 = sphi 0, %s61
      %s83 = sphi 0, %s85
      %s86 = sphi 0, %s83
      %s87 = sphi 0, %s86
      %s103 = sphi 0, %s87
      %s107 = sphi 0, %s107
      %s109 = sphi 0, %s107
      %s110 = sphi 0, %s109
      %s124 = sphi 0, %s110
      %s128 = sphi 0, %s128
      %s130 = sphi 0, %s128
      %s131 = sphi 0, %s130
      %s145 = sphi 0, %s131
      %s151 = sphi 0, %s153
      %s154 = sphi 0, %s151
      %s155 = sphi 0, %s154
      %s171 = sphi 0, %s155
    $region4: #{tpu_custom_call.1} parent=1 // loop_header_branch
      %24 = sbr.rel (%p22) target = $region8
    $region5: #{tpu_custom_call.1} parent=1 // loop_body
      %s26 = ssub.s32 %s21, 1
      %s27 = ssub.s32 %s21, 2
      %s28 = sadd.s32 %s21, 1
      %s29 = ssub.s32 %s21, %s28
      %p30 = scmp.eq.s32.totalorder %s29, 0
      %s32 = sadd.s32 %s31, 1
      %s33 = scalar_select %p30, %s31, %s32
      %p36 = pneg %p30
      %p37 = scmp.eq.s32.totalorder %s21, 1
      %p38 = por %p36, %p37
      %p39 = scmp.ne.s32.totalorder %s31, %s34
      %p40 = scmp.eq.s32.totalorder %s21, 0
      %p41 = por %p39, %p40
      %p42 = scmp.ne.s32.totalorder %s31, %s34
      %p43 = scmp.eq.s32.totalorder %s26, 1
      %p44 = por %p42, %p43
      %p45 = scmp.ne.s32.totalorder %s34, %s35
      %p46 = scmp.eq.s32.totalorder %s26, 0
      %p47 = por %p45, %p46
      %p48 = scmp.ne.s32.totalorder %s34, %s35
      %p49 = scmp.eq.s32.totalorder %s27, 1
      %p50 = por %p48, %p49
      %p52 = scmp.ne.s32.totalorder %s35, %s51
      %p53 = scmp.eq.s32.totalorder %s27, 0
      %p54 = por %p52, %p53
      %s55 = ssub.s32 %s21, %s28
      %p56 = scmp.eq.s32.totalorder %s55, 0
      %s58 = sadd.s32 %s57, 1
      %s59 = scalar_select %p56, %s57, %s58
      %p62 = pneg %p56
      %p63 = scmp.eq.s32.totalorder %s21, 1
      %p64 = por %p62, %p63
      %p65 = scmp.ne.s32.totalorder %s57, %s60
      %p66 = scmp.eq.s32.totalorder %s21, 0
      %p67 = por %p65, %p66
      %p68 = scmp.ne.s32.totalorder %s57, %s60
      %p69 = scmp.eq.s32.totalorder %s26, 1
      %p70 = por %p68, %p69
      %p71 = scmp.ne.s32.totalorder %s60, %s61
      %p72 = scmp.eq.s32.totalorder %s26, 0
      %p73 = por %p71, %p72
      %p74 = scmp.ne.s32.totalorder %s60, %s61
      %p75 = scmp.eq.s32.totalorder %s27, 1
      %p76 = por %p74, %p75
      %p78 = scmp.ne.s32.totalorder %s61, %s77
      %p79 = scmp.eq.s32.totalorder %s27, 0
      %p80 = por %p78, %p79
      %s81 = ssub.s32 %s21, %s28
      %p82 = scmp.eq.s32.totalorder %s81, 0
      %s84 = sadd.s32 %s83, 1
      %s85 = scalar_select %p82, %s83, %s84
      %p88 = pneg %p82
      %p89 = scmp.eq.s32.totalorder %s21, 1
      %p90 = por %p88, %p89
      %p91 = scmp.ne.s32.totalorder %s83, %s86
      %p92 = scmp.eq.s32.totalorder %s21, 0
      %p93 = por %p91, %p92
      %p94 = scmp.ne.s32.totalorder %s83, %s86
      %p95 = scmp.eq.s32.totalorder %s26, 1
      %p96 = por %p94, %p95
      %p97 = scmp.ne.s32.totalorder %s86, %s87
      %p98 = scmp.eq.s32.totalorder %s26, 0
      %p99 = por %p97, %p98
      %p100 = scmp.ne.s32.totalorder %s86, %s87
      %p101 = scmp.eq.s32.totalorder %s27, 1
      %p102 = por %p100, %p101
      %p104 = scmp.ne.s32.totalorder %s87, %s103
      %p105 = scmp.eq.s32.totalorder %s27, 0
      %p106 = por %p104, %p105
      %s108 = sadd.s32 %s107, 1
      %p111 = scmp.eq.s32.totalorder %s21, 1
      %p112 = scmp.ne.s32.totalorder %s107, %s109
      %p113 = scmp.eq.s32.totalorder %s21, 0
      %p114 = por %p112, %p113
      %p115 = scmp.ne.s32.totalorder %s107, %s109
      %p116 = scmp.eq.s32.totalorder %s26, 1
      %p117 = por %p115, %p116
      %p118 = scmp.ne.s32.totalorder %s109, %s110
      %p119 = scmp.eq.s32.totalorder %s26, 0
      %p120 = por %p118, %p119
      %p121 = scmp.ne.s32.totalorder %s109, %s110
      %p122 = scmp.eq.s32.totalorder %s27, 1
      %p123 = por %p121, %p122
      %p125 = scmp.ne.s32.totalorder %s110, %s124
      %p126 = scmp.eq.s32.totalorder %s27, 0
      %p127 = por %p125, %p126
      %s129 = sadd.s32 %s128, 1
      %p132 = scmp.eq.s32.totalorder %s21, 1
      %p133 = scmp.ne.s32.totalorder %s128, %s130
      %p134 = scmp.eq.s32.totalorder %s21, 0
      %p135 = por %p133, %p134
      %p136 = scmp.ne.s32.totalorder %s128, %s130
      %p137 = scmp.eq.s32.totalorder %s26, 1
      %p138 = por %p136, %p137
      %p139 = scmp.ne.s32.totalorder %s130, %s131
      %p140 = scmp.eq.s32.totalorder %s26, 0
      %p141 = por %p139, %p140
      %p142 = scmp.ne.s32.totalorder %s130, %s131
      %p143 = scmp.eq.s32.totalorder %s27, 1
      %p144 = por %p142, %p143
      %p146 = scmp.ne.s32.totalorder %s131, %s145
      %p147 = scmp.eq.s32.totalorder %s27, 0
      %p148 = por %p146, %p147
      %s149 = ssub.s32 %s21, %s28
      %p150 = scmp.eq.s32.totalorder %s149, 0
      %s152 = sadd.s32 %s151, 1
      %s153 = scalar_select %p150, %s151, %s152
      %p156 = pneg %p150
      %p157 = scmp.eq.s32.totalorder %s21, 1
      %p158 = por %p156, %p157
      %p159 = scmp.ne.s32.totalorder %s151, %s154
      %p160 = scmp.eq.s32.totalorder %s21, 0
      %p161 = por %p159, %p160
      %p162 = scmp.ne.s32.totalorder %s151, %s154
      %p163 = scmp.eq.s32.totalorder %s26, 1
      %p164 = por %p162, %p163
      %p165 = scmp.ne.s32.totalorder %s154, %s155
      %p166 = scmp.eq.s32.totalorder %s26, 0
      %p167 = por %p165, %p166
      %p168 = scmp.ne.s32.totalorder %s154, %s155
      %p169 = scmp.eq.s32.totalorder %s27, 1
      %p170 = por %p168, %p169
      %p172 = scmp.ne.s32.totalorder %s155, %s171
      %p173 = scmp.eq.s32.totalorder %s27, 0
      %p174 = por %p172, %p173
      %p175 = scmp.le.s32.totalorder 1, %s21
      %p176 = scmp.lt.s32.totalorder %s21, 3
      %p177 = pnand %p175, %p176
      %p178 = pneg %p177
      // Predicated region
      $region9: #{tpu_custom_call.1} parent=5 // pred_check
        _
      $region10: #{tpu_custom_call.1} parent=5 // pred_check_branch
        %180 = sbr.rel (%p177) target = $region12
      $region11: #{tpu_custom_call.1} parent=5 // pred_region
        %s181 = ssub.s32 %s21, 1
        // Predicated region
        $region13: #{tpu_custom_call.1} parent=11 // pred_check
          %p182 = pneg %p120
        $region14: #{tpu_custom_call.1} parent=11 // pred_check_branch
          %184 = sbr.rel (%p182) target = $region16
        $region15: #{tpu_custom_call.1} parent=11 // pred_region
          %s186 = ssub.s32 10112, 10112
          %187 = vsyncadd [#allocation6], %s186
          %s188 = sshll.u32 [#allocation7], 4
          %s189 = int_to_ptr.vmem [resolvable:$true] %s188
          %194 = dma.hbm_to_vmem [thread:$0]  %s3, 10112, %s189, [#allocation6], 64, 64, 4
        $region16: #{tpu_custom_call.1} parent=11 // pred_fallthru
          _
        // Predicated region
        $region17: #{tpu_custom_call.1} parent=11 // pred_check
          %p195 = pneg %p141
        $region18: #{tpu_custom_call.1} parent=11 // pred_check_branch
          %197 = sbr.rel (%p195) target = $region20
        $region19: #{tpu_custom_call.1} parent=11 // pred_region
          %s199 = ssub.s32 4608, 4608
          %200 = vsyncadd [#allocation9], %s199
          %s201 = sshll.u32 [#allocation8], 4
          %s202 = int_to_ptr.vmem [resolvable:$true] %s201
          %207 = dma.hbm_to_vmem [thread:$0]  %s4, 4608, %s202, [#allocation9], 256, 256, 16
        $region20: #{tpu_custom_call.1} parent=11 // pred_fallthru
          _
      $region12: #{tpu_custom_call.1} parent=5 // pred_fallthru
        _
      %p208 = scmp.lt.s32.totalorder %s21, 2
      // Predicated region
      $region21: #{tpu_custom_call.1} parent=5 // pred_check
        %p209 = pneg %p208
      $region22: #{tpu_custom_call.1} parent=5 // pred_check_branch
        %211 = sbr.rel (%p209) target = $region24
      $region23: #{tpu_custom_call.1} parent=5 // pred_region
        // Predicated region
        $region25: #{tpu_custom_call.1} parent=23 // pred_check
          %p212 = pneg %p41
        $region26: #{tpu_custom_call.1} parent=23 // pred_check_branch
          %214 = sbr.rel (%p212) target = $region28
        $region27: #{tpu_custom_call.1} parent=23 // pred_region
          %s215 = sand.u32 %s31, 1
          %s216 = scalar_lea.sflag [#allocation3], %s215
          %s217 = sand.u32 %s31, 1
          %s218 = smul.addr %s217, 64
          %s219 = scalar_lea.vmem [#allocation2], %s218
          %s220 = smul.u32 4, %s21
          %s222 = ssub.s32 1024, 1024
          %223 = vsyncadd %s216, %s222
          %s224 = smul.addr %s220, 2
          %s225 = smul.addr %s224, 128
          %s226 = scalar_lea.hbm %s0, %s225
          %s227 = sshll.u32 %s219, 4
          %s228 = int_to_ptr.vmem [resolvable:$true] %s227
          %233 = dma.hbm_to_vmem [thread:$0]  %s226, 1024, %s228, %s216, 256, 256, 16
        $region28: #{tpu_custom_call.1} parent=23 // pred_fallthru
          _
        // Predicated region
        $region29: #{tpu_custom_call.1} parent=23 // pred_check
          %p234 = pneg %p67
        $region30: #{tpu_custom_call.1} parent=23 // pred_check_branch
          %236 = sbr.rel (%p234) target = $region32
        $region31: #{tpu_custom_call.1} parent=23 // pred_region
          %s237 = smul.u32 4, %s21
          %p238 = scmp.lt.s32.totalorder %s237, 7
          %s239 = scalar_select %p238, %s237, 7
          %s240 = smul.addr %s239, 8
          %s241 = scalar_lea.vmem %s1, %s240
          %s242 = smul.u32 4, %s21
        $region32: #{tpu_custom_call.1} parent=23 // pred_fallthru
          _
        // Predicated region
        $region33: #{tpu_custom_call.1} parent=23 // pred_check
          %p243 = pneg %p93
        $region34: #{tpu_custom_call.1} parent=23 // pred_check_branch
          %245 = sbr.rel (%p243) target = $region36
        $region35: #{tpu_custom_call.1} parent=23 // pred_region
          %s246 = sand.u32 %s21, 1
          %s247 = scalar_lea.sflag [#allocation6], %s246
          %s248 = sand.u32 %s83, 1
          %s249 = smul.addr %s248, 64
          %s250 = scalar_lea.vmem [#allocation5], %s249
          %s251 = smul.u32 4, %s21
          %s253 = ssub.s32 1024, 1024
          %254 = vsyncadd %s247, %s253
          %s255 = smul.addr %s251, 2
          %s256 = smul.addr %s255, 128
          %s257 = scalar_lea.hbm %s2, %s256
          %s258 = sshll.u32 %s250, 4
          %s259 = int_to_ptr.vmem [resolvable:$true] %s258
          %264 = dma.hbm_to_vmem [thread:$0]  %s257, 1024, %s259, %s247, 256, 256, 16
        $region36: #{tpu_custom_call.1} parent=23 // pred_fallthru
          _
      $region24: #{tpu_custom_call.1} parent=5 // pred_fallthru
        _
      %p265 = scmp.le.s32.totalorder 1, %s21
      %p266 = scmp.lt.s32.totalorder %s21, 3
      %p267 = pnand %p265, %p266
      %p268 = pneg %p267
      // Predicated region
      $region37: #{tpu_custom_call.1} parent=5 // pred_check
        _
      $region38: #{tpu_custom_call.1} parent=5 // pred_check_branch
        %270 = sbr.rel (%p267) target = $region40
      $region39: #{tpu_custom_call.1} parent=5 // pred_region
        %s271 = ssub.s32 %s21, 1
        %s272 = sand.u32 %s34, 1
        %s273 = scalar_lea.sflag [#allocation3], %s272
        %s274 = sand.u32 %s34, 1
        %s275 = smul.addr %s274, 64
        %s276 = scalar_lea.vmem [#allocation2], %s275
        // Predicated region
        $region41: #{tpu_custom_call.1} parent=39 // pred_check
          %p277 = pneg %p47
        $region42: #{tpu_custom_call.1} parent=39 // pred_check_branch
          %279 = sbr.rel (%p277) target = $region44
        $region43: #{tpu_custom_call.1} parent=39 // pred_region
          %280 = dma.done %s273, 1024
        $region44: #{tpu_custom_call.1} parent=39 // pred_fallthru
          _
        %s281 = sand.u32 %s26, 1
        %s282 = scalar_lea.sflag [#allocation6], %s281
        %s283 = sand.u32 %s86, 1
        %s284 = smul.addr %s283, 64
        %s285 = scalar_lea.vmem [#allocation5], %s284
        // Predicated region
        $region45: #{tpu_custom_call.1} parent=39 // pred_check
          %p286 = pneg %p99
        $region46: #{tpu_custom_call.1} parent=39 // pred_check_branch
          %288 = sbr.rel (%p286) target = $region48
        $region47: #{tpu_custom_call.1} parent=39 // pred_region
          %289 = dma.done %s282, 1024
        $region48: #{tpu_custom_call.1} parent=39 // pred_fallthru
          _
        // Predicated region
        $region49: #{tpu_custom_call.1} parent=39 // pred_check
          %p290 = pneg %p120
        $region50: #{tpu_custom_call.1} parent=39 // pred_check_branch
          %292 = sbr.rel (%p290) target = $region52
        $region51: #{tpu_custom_call.1} parent=39 // pred_region
          %293 = dma.done [#allocation6], 10112
        $region52: #{tpu_custom_call.1} parent=39 // pred_fallthru
          _
        // Predicated region
        $region53: #{tpu_custom_call.1} parent=39 // pred_check
          %p294 = pneg %p141
        $region54: #{tpu_custom_call.1} parent=39 // pred_check_branch
          %296 = sbr.rel (%p294) target = $region56
        $region55: #{tpu_custom_call.1} parent=39 // pred_region
          %297 = dma.done [#allocation9], 4608
        $region56: #{tpu_custom_call.1} parent=39 // pred_fallthru
          _
        %s298 = sand.u32 %s34, 1
        %s299 = scalar_lea.sflag [#allocation3], %s298
        %s300 = sand.u32 %s34, 1
        %s301 = smul.addr %s300, 64
        %s302 = scalar_lea.vmem [#allocation2], %s301
        %p303 = pneg %p47
        %p304 = pneg %p44
        %s305 = smul.u32 4, %s26
        %p306 = scmp.lt.s32.totalorder %s305, 7
        %s307 = scalar_select %p306, %s305, 7
        %s308 = smul.addr %s307, 8
        %s309 = scalar_lea.vmem %s1, %s308
        %p310 = pneg %p73
        %p311 = pneg %p70
        %s312 = sand.u32 %s26, 1
        %s313 = scalar_lea.sflag [#allocation6], %s312
        %s314 = sand.u32 %s86, 1
        %s315 = smul.addr %s314, 64
        %s316 = scalar_lea.vmem [#allocation5], %s315
        %p317 = pneg %p99
        %p318 = pneg %p96
        %p319 = pneg %p120
        %p320 = pneg %p117
        %p321 = pneg %p141
        %p322 = pneg %p138
        %p323 = pneg %p167
        %p324 = pneg %p164
        %s325 = sand.u32 %s154, 1
        %s326 = scalar_lea.sflag [#allocation4], %s325
        %s327 = sand.u32 %s154, 1
        %s328 = smul.addr %s327, 224
        %s329 = scalar_lea.vmem [#allocation10], %s328
        %s330 = smul.u32 4, %s26
        %s331 = smul.u32 4, %s26
        %p332 = scmp.lt.s32.totalorder %s331, 7
        %s333 = scalar_select %p332, %s331, 7
        %s334 = smul.addr %s333, 8
        %s335 = scalar_lea.vmem %s1, %s334
        %s336 = smul.u32 4, %s26
        %s337 = smul.u32 4, %s26
        %s338 = smul.u32 4, %s26
        %v340 = vld [vmem:[%s276] sm:$0xff]
        %v341 = vld [vmem:[%s276 + $0x8] sm:$0xff]
        %v342 = vld [vmem:[%s276 + $0x10] sm:$0xff]
        %v343 = vld [vmem:[%s276 + $0x18] sm:$0xff]
        %v344 = vld [vmem:[%s276 + $0x20] sm:$0xff]
        %v345 = vld [vmem:[%s276 + $0x28] sm:$0xff]
        %v346 = vld [vmem:[%s276 + $0x30] sm:$0xff]
        %v347 = vld [vmem:[%s276 + $0x38] sm:$0xff]
        %v348 = vld [vmem:[%s335] sm:$0xff]
        %v349 = vld [vmem:[%s335 + $0x8] sm:$0xff]
        %v350 = vld [vmem:[%s335 + $0x10] sm:$0xff]
        %v351 = vld [vmem:[%s335 + $0x18] sm:$0xff]
        %v352 = vld [vmem:[%s285] sm:$0xff]
        %v353 = vld [vmem:[%s285 + $0x8] sm:$0xff]
        %v354 = vld [vmem:[%s285 + $0x10] sm:$0xff]
        %v355 = vld [vmem:[%s285 + $0x18] sm:$0xff]
        %v356 = vld [vmem:[%s285 + $0x20] sm:$0xff]
        %v357 = vld [vmem:[%s285 + $0x28] sm:$0xff]
        %v358 = vld [vmem:[%s285 + $0x30] sm:$0xff]
        %v359 = vld [vmem:[%s285 + $0x38] sm:$0xff]
        %v360 = vld [vmem:[#allocation7] sm:$0xf]
        %v361 = vld [vmem:[#allocation7 + $0x4] sm:$0xf]
        %v362 = vld [vmem:[#allocation7 + $0x8] sm:$0xf]
        %v363 = vld [vmem:[#allocation7 + $0xc] sm:$0xf]
        %v364 = vld [vmem:[#allocation7 + $0x10] sm:$0xf]
        %v365 = vld [vmem:[#allocation7 + $0x14] sm:$0xf]
        %v366 = vld [vmem:[#allocation7 + $0x18] sm:$0xf]
        %v367 = vld [vmem:[#allocation7 + $0x1c] sm:$0xf]
        %v368 = vld [vmem:[#allocation7 + $0x20] sm:$0xf]
        %v369 = vld [vmem:[#allocation7 + $0x24] sm:$0xf]
        %v370 = vld [vmem:[#allocation7 + $0x28] sm:$0xf]
        %v371 = vld [vmem:[#allocation7 + $0x2c] sm:$0xf]
        %v372 = vld [vmem:[#allocation7 + $0x30] sm:$0xf]
        %v373 = vld [vmem:[#allocation7 + $0x34] sm:$0xf]
        %v374 = vld [vmem:[#allocation7 + $0x38] sm:$0xf]
        %v375 = vld [vmem:[#allocation7 + $0x3c] sm:$0xf]
        %v376 = vld [vmem:[#allocation7 + $0x40] sm:$0xf]
        %v377 = vld [vmem:[#allocation7 + $0x44] sm:$0xf]
        %v378 = vld [vmem:[#allocation7 + $0x48] sm:$0xf]
        %v379 = vld [vmem:[#allocation7 + $0x4c] sm:$0xf]
        %v380 = vld [vmem:[#allocation7 + $0x50] sm:$0xf]
        %v381 = vld [vmem:[#allocation7 + $0x54] sm:$0xf]
        %v382 = vld [vmem:[#allocation7 + $0x58] sm:$0xf]
        %v383 = vld [vmem:[#allocation7 + $0x5c] sm:$0xf]
        %v384 = vld [vmem:[#allocation7 + $0x60] sm:$0xf]
        %v385 = vld [vmem:[#allocation7 + $0x64] sm:$0xf]
        %v386 = vld [vmem:[#allocation7 + $0x68] sm:$0xf]
        %v387 = vld [vmem:[#allocation7 + $0x6c] sm:$0xf]
        %v388 = vld [vmem:[#allocation7 + $0x70] sm:$0xf]
        %v389 = vld [vmem:[#allocation7 + $0x74] sm:$0xf]
        %v390 = vld [vmem:[#allocation7 + $0x78] sm:$0xf]
        %v391 = vld [vmem:[#allocation7 + $0x7c] sm:$0xf]
        %v392 = vpack.c.bf16 %v342, %v340
        %v393 = vpack.c.bf16 %v343, %v341
        %v394 = vpack.c.bf16 %v346, %v344
        %v395 = vpack.c.bf16 %v347, %v345
        %v396 = vld [vmem:[#allocation7 + $0x80] sm:$0x1]
        %v397 = vunpack.c.l.bf16 %v396
        %v398 = vlaneseq
        %v399 = vshrl.u32 %v398, 7
        %v400 = vsub.s32 0, %v399
        %v401 = vrot.slane %v397, %v400
        %v434 = vunpack.c.l.b16 %v360
        %v435 = vunpack.c.l.b16 %v361
        %v436 = vunpack.c.l.b16 %v362
        %v437 = vunpack.c.l.b16 %v363
        %v438 = vunpack.c.l.b16 %v364
        %v439 = vunpack.c.l.b16 %v365
        %v440 = vunpack.c.l.b16 %v366
        %v441 = vunpack.c.l.b16 %v367
        %v442 = vunpack.c.l.b16 %v368
        %v443 = vunpack.c.l.b16 %v369
        %v444 = vunpack.c.l.b16 %v370
        %v445 = vunpack.c.l.b16 %v371
        %v446 = vunpack.c.l.b16 %v372
        %v447 = vunpack.c.l.b16 %v373
        %v448 = vunpack.c.l.b16 %v374
        %v449 = vunpack.c.l.b16 %v375
        %v450 = vunpack.c.l.b16 %v376
        %v451 = vunpack.c.l.b16 %v377
        %v452 = vunpack.c.l.b16 %v378
        %v453 = vunpack.c.l.b16 %v379
        %v454 = vunpack.c.l.b16 %v380
        %v455 = vunpack.c.l.b16 %v381
        %v456 = vunpack.c.l.b16 %v382
        %v457 = vunpack.c.l.b16 %v383
        %v458 = vunpack.c.l.b16 %v384
        %v459 = vunpack.c.l.b16 %v385
        %v460 = vunpack.c.l.b16 %v386
        %v461 = vunpack.c.l.b16 %v387
        %v462 = vunpack.c.l.b16 %v388
        %v463 = vunpack.c.l.b16 %v389
        %v464 = vunpack.c.l.b16 %v390
        %v465 = vunpack.c.l.b16 %v391
        %v466 = vpack.c.b16 %v435, %v434
        %v467 = vpack.c.b16 %v437, %v436
        %v468 = vpack.c.b16 %v439, %v438
        %v469 = vpack.c.b16 %v441, %v440
        %v470 = vpack.c.b16 %v443, %v442
        %v471 = vpack.c.b16 %v445, %v444
        %v472 = vpack.c.b16 %v447, %v446
        %v473 = vpack.c.b16 %v449, %v448
        %v474 = vpack.c.b16 %v451, %v450
        %v475 = vpack.c.b16 %v453, %v452
        %v476 = vpack.c.b16 %v455, %v454
        %v477 = vpack.c.b16 %v457, %v456
        %v478 = vpack.c.b16 %v459, %v458
        %v479 = vpack.c.b16 %v461, %v460
        %v480 = vpack.c.b16 %v463, %v462
        %v481 = vpack.c.b16 %v465, %v464
        %498 = vmatprep.subr.bf16.mxu0 0
        %499 = vmatpush1.bf16.msra.mxu0 %v466
        %500 = vmatprep.subr.bf16.mxu0 0
        %501 = vmatpush1.bf16.msra.mxu0 %v467
        %502 = vmatprep.subr.bf16.mxu0 0
        %503 = vmatpush1.bf16.msra.mxu0 %v468
        %504 = vmatprep.subr.bf16.mxu0 0
        %505 = vmatpush1.bf16.msra.mxu0 %v469
        %506 = vmatprep.subr.bf16.mxu0 0
        %507 = vmatpush1.bf16.msra.mxu0 %v470
        %508 = vmatprep.subr.bf16.mxu0 0
        %509 = vmatpush1.bf16.msra.mxu0 %v471
        %510 = vmatprep.subr.bf16.mxu0 0
        %511 = vmatpush1.bf16.msra.mxu0 %v472
        %512 = vmatprep.subr.bf16.mxu0 0
        %513 = vmatpush1.bf16.msra.mxu0 %v473
        %514 = vmatprep.subr.bf16.mxu0 0
        %515 = vmatpush1.bf16.msra.mxu0 %v474
        %516 = vmatprep.subr.bf16.mxu0 0
        %517 = vmatpush1.bf16.msra.mxu0 %v475
        %518 = vmatprep.subr.bf16.mxu0 0
        %519 = vmatpush1.bf16.msra.mxu0 %v476
        %520 = vmatprep.subr.bf16.mxu0 0
        %521 = vmatpush1.bf16.msra.mxu0 %v477
        %522 = vmatprep.subr.bf16.mxu0 0
        %523 = vmatpush1.bf16.msra.mxu0 %v478
        %524 = vmatprep.subr.bf16.mxu0 0
        %525 = vmatpush1.bf16.msra.mxu0 %v479
        %526 = vmatprep.subr.bf16.mxu0 0
        %527 = vmatpush1.bf16.msra.mxu0 %v480
        %528 = vmatprep.subr.bf16.mxu0 0
        %529 = vmatpush1.bf16.msra.mxu0 %v481
        %530 = vmatprep.mubr.bf16.mxu0 %v393
        %531 = vmatmul.mubr.bf16.gmra.mrb[0].mxu0 %v392
        %v532 = vpop.f32.mrb[0].mxu0
        %v533 = vadd.f32 %v401, %v532
        %v534 = vpop.f32.mrb[0].mxu0
        %v535 = vpop.f32.mrb[0].mxu0
        %v536 = vadd.f32 %v401, %v535
        %v537 = vpop.f32.mrb[0].mxu0
        %538 = vmatprep.mubr.bf16.mxu0 %v395
        %539 = vmatmul.mubr.bf16.gmra.mrb[0].mxu0 %v394
        %v540 = vpop.f32.mrb[0].mxu0
        %v541 = vadd.f32 %v401, %v540
        %v542 = vpop.f32.mrb[0].mxu0
        %v543 = vpop.f32.mrb[0].mxu0
        %v544 = vadd.f32 %v401, %v543
        %v545 = vpop.f32.mrb[0].mxu0
        %546 = vdwg.mxu0
        %v547 = vmul.f32 %v533, 0.1
        %v548 = vmul.f32 %v536, 0.1
        %v549 = vmul.f32 %v541, 0.1
        %v550 = vmul.f32 %v544, 0.1
        %v551 = vmax.f32 %v533, %v547
        %v552 = vmax.f32 %v536, %v548
        %v553 = vmax.f32 %v541, %v549
        %v554 = vmax.f32 %v544, %v550
        %v555 = vld [vmem:[#allocation7 + $0x88] sm:$0xf]
        %v556 = vld [vmem:[#allocation7 + $0x8c] sm:$0xf]
        %v557 = vld [vmem:[#allocation7 + $0x90] sm:$0xf]
        %v558 = vld [vmem:[#allocation7 + $0x94] sm:$0xf]
        %v559 = vld [vmem:[#allocation7 + $0x98] sm:$0xf]
        %v560 = vld [vmem:[#allocation7 + $0x9c] sm:$0xf]
        %v561 = vld [vmem:[#allocation7 + $0xa0] sm:$0xf]
        %v562 = vld [vmem:[#allocation7 + $0xa4] sm:$0xf]
        %v563 = vld [vmem:[#allocation7 + $0xa8] sm:$0xf]
        %v564 = vld [vmem:[#allocation7 + $0xac] sm:$0xf]
        %v565 = vld [vmem:[#allocation7 + $0xb0] sm:$0xf]
        %v566 = vld [vmem:[#allocation7 + $0xb4] sm:$0xf]
        %v567 = vld [vmem:[#allocation7 + $0xb8] sm:$0xf]
        %v568 = vld [vmem:[#allocation7 + $0xbc] sm:$0xf]
        %v569 = vld [vmem:[#allocation7 + $0xc0] sm:$0xf]
        %v570 = vld [vmem:[#allocation7 + $0xc4] sm:$0xf]
        %v571 = vpack.c.bf16 %v552, %v551
        %v572 = vpack.c.bf16 %v554, %v553
        %v573 = vld [vmem:[#allocation7 + $0xc8] sm:$0x1]
        %v574 = vunpack.c.l.bf16 %v573
        %v575 = vlaneseq
        %v576 = vshrl.u32 %v575, 7
        %v577 = vsub.s32 0, %v576
        %v578 = vrot.slane %v574, %v577
        %v595 = vunpack.c.l.b16 %v555
        %v596 = vunpack.c.l.b16 %v556
        %v597 = vunpack.c.l.b16 %v557
        %v598 = vunpack.c.l.b16 %v558
        %v599 = vunpack.c.l.b16 %v559
        %v600 = vunpack.c.l.b16 %v560
        %v601 = vunpack.c.l.b16 %v561
        %v602 = vunpack.c.l.b16 %v562
        %v603 = vunpack.c.l.b16 %v563
        %v604 = vunpack.c.l.b16 %v564
        %v605 = vunpack.c.l.b16 %v565
        %v606 = vunpack.c.l.b16 %v566
        %v607 = vunpack.c.l.b16 %v567
        %v608 = vunpack.c.l.b16 %v568
        %v609 = vunpack.c.l.b16 %v569
        %v610 = vunpack.c.l.b16 %v570
        %v611 = vpack.c.b16 %v596, %v595
        %v612 = vpack.c.b16 %v598, %v597
        %v613 = vpack.c.b16 %v600, %v599
        %v614 = vpack.c.b16 %v602, %v601
        %v615 = vpack.c.b16 %v604, %v603
        %v616 = vpack.c.b16 %v606, %v605
        %v617 = vpack.c.b16 %v608, %v607
        %v618 = vpack.c.b16 %v610, %v609
        %627 = vmatprep.subr.bf16.mxu0 0
        %628 = vmatpush1.bf16.msra.mxu0 %v611
        %629 = vmatprep.subr.bf16.mxu0 0
        %630 = vmatpush1.bf16.msra.mxu0 %v612
        %631 = vmatprep.subr.bf16.mxu0 0
        %632 = vmatpush1.bf16.msra.mxu0 %v613
        %633 = vmatprep.subr.bf16.mxu0 0
        %634 = vmatpush1.bf16.msra.mxu0 %v614
        %635 = vmatprep.subr.bf16.mxu0 0
        %636 = vmatpush1.bf16.msra.mxu0 %v615
        %637 = vmatprep.subr.bf16.mxu0 0
        %638 = vmatpush1.bf16.msra.mxu0 %v616
        %639 = vmatprep.subr.bf16.mxu0 0
        %640 = vmatpush1.bf16.msra.mxu0 %v617
        %641 = vmatprep.subr.bf16.mxu0 0
        %642 = vmatpush1.bf16.msra.mxu0 %v618
        %643 = vmatprep.subr.bf16.mxu0 0
        %644 = vmatpush1.bf16.msra.mxu0 0
        %645 = vmatprep.subr.bf16.mxu0 0
        %646 = vmatpush1.bf16.msra.mxu0 0
        %647 = vmatprep.subr.bf16.mxu0 0
        %648 = vmatpush1.bf16.msra.mxu0 0
        %649 = vmatprep.subr.bf16.mxu0 0
        %650 = vmatpush1.bf16.msra.mxu0 0
        %651 = vmatprep.subr.bf16.mxu0 0
        %652 = vmatpush1.bf16.msra.mxu0 0
        %653 = vmatprep.subr.bf16.mxu0 0
        %654 = vmatpush1.bf16.msra.mxu0 0
        %655 = vmatprep.subr.bf16.mxu0 0
        %656 = vmatpush1.bf16.msra.mxu0 0
        %657 = vmatprep.subr.bf16.mxu0 0
        %658 = vmatpush1.bf16.msra.mxu0 0
        %659 = vmatprep.mubr.bf16.mxu0 0
        %660 = vmatmul.mubr.bf16.gmra.mrb[0].mxu0 %v571
        %v661 = vpop.f32.mrb[0].mxu0
        %v662 = vadd.f32 %v578, %v661
        %v663 = vpop.f32.mrb[0].mxu0
        %v664 = vpop.f32.mrb[0].mxu0
        %v665 = vadd.f32 %v578, %v664
        %v666 = vpop.f32.mrb[0].mxu0
        %667 = vmatprep.mubr.bf16.mxu0 0
        %668 = vmatmul.mubr.bf16.gmra.mrb[0].mxu0 %v572
        %v669 = vpop.f32.mrb[0].mxu0
        %v670 = vadd.f32 %v578, %v669
        %v671 = vpop.f32.mrb[0].mxu0
        %v672 = vpop.f32.mrb[0].mxu0
        %v673 = vadd.f32 %v578, %v672
        %v674 = vpop.f32.mrb[0].mxu0
        %675 = vdwg.mxu0
        %v676 = vmul.f32 %v662, 0.1
        %v677 = vmul.f32 %v665, 0.1
        %v678 = vmul.f32 %v670, 0.1
        %v679 = vmul.f32 %v673, 0.1
        %v680 = vmax.f32 %v662, %v676
        %v681 = vmax.f32 %v665, %v677
        %v682 = vmax.f32 %v670, %v678
        %v683 = vmax.f32 %v673, %v679
        %v684 = vld [vmem:[#allocation7 + $0xd0] sm:$0xf]
        %v685 = vld [vmem:[#allocation7 + $0xd4] sm:$0xf]
        %v686 = vld [vmem:[#allocation7 + $0xd8] sm:$0xf]
        %v687 = vld [vmem:[#allocation7 + $0xdc] sm:$0xf]
        %v688 = vld [vmem:[#allocation7 + $0xe0] sm:$0xf]
        %v689 = vld [vmem:[#allocation7 + $0xe4] sm:$0xf]
        %v690 = vld [vmem:[#allocation7 + $0xe8] sm:$0xf]
        %v691 = vld [vmem:[#allocation7 + $0xec] sm:$0xf]
        %v692 = vld [vmem:[#allocation7 + $0xf0] sm:$0xf]
        %v693 = vld [vmem:[#allocation7 + $0xf4] sm:$0xf]
        %v694 = vld [vmem:[#allocation7 + $0xf8] sm:$0xf]
        %v695 = vld [vmem:[#allocation7 + $0xfc] sm:$0xf]
        %v696 = vld [vmem:[#allocation7 + $0x100] sm:$0xf]
        %v697 = vld [vmem:[#allocation7 + $0x104] sm:$0xf]
        %v698 = vld [vmem:[#allocation7 + $0x108] sm:$0xf]
        %v699 = vld [vmem:[#allocation7 + $0x10c] sm:$0xf]
        %v700 = vpack.c.bf16 %v681, %v680
        %v701 = vpack.c.bf16 %v683, %v682
        %v702 = vld [vmem:[#allocation7 + $0x110] sm:$0xf]
        %v703 = vld [vmem:[#allocation7 + $0x114] sm:$0xf]
        %v704 = vpack.c.bf16 %v349, %v348
        %v705 = vpack.c.bf16 %v351, %v350
        %v708 = vunpack.c.l.b16 %v702
        %v709 = vunpack.c.l.b16 %v703
        %v710 = vpack.c.b16 %v709, %v708
        %vm712 = vcmask 130048
        %v714 = vsel %vm712, %v704, 0
        %v717 = vsel %vm712, %v705, 0
        %719 = vmatprep.subr.bf16.mxu0 0
        %720 = vmatpush1.bf16.msra.mxu0 %v710
        %721 = vmatprep.subr.bf16.mxu0 0
        %722 = vmatpush1.bf16.msra.mxu0 0
        %723 = vmatprep.subr.bf16.mxu0 0
        %724 = vmatpush1.bf16.msra.mxu0 0
        %725 = vmatprep.subr.bf16.mxu0 0
        %726 = vmatpush1.bf16.msra.mxu0 0
        %727 = vmatprep.subr.bf16.mxu0 0
        %728 = vmatpush1.bf16.msra.mxu0 0
        %729 = vmatprep.subr.bf16.mxu0 0
        %730 = vmatpush1.bf16.msra.mxu0 0
        %731 = vmatprep.subr.bf16.mxu0 0
        %732 = vmatpush1.bf16.msra.mxu0 0
        %733 = vmatprep.subr.bf16.mxu0 0
        %734 = vmatpush1.bf16.msra.mxu0 0
        %735 = vmatprep.subr.bf16.mxu0 0
        %736 = vmatpush1.bf16.msra.mxu0 0
        %737 = vmatprep.subr.bf16.mxu0 0
        %738 = vmatpush1.bf16.msra.mxu0 0
        %739 = vmatprep.subr.bf16.mxu0 0
        %740 = vmatpush1.bf16.msra.mxu0 0
        %741 = vmatprep.subr.bf16.mxu0 0
        %742 = vmatpush1.bf16.msra.mxu0 0
        %743 = vmatprep.subr.bf16.mxu0 0
        %744 = vmatpush1.bf16.msra.mxu0 0
        %745 = vmatprep.subr.bf16.mxu0 0
        %746 = vmatpush1.bf16.msra.mxu0 0
        %747 = vmatprep.subr.bf16.mxu0 0
        %748 = vmatpush1.bf16.msra.mxu0 0
        %749 = vmatprep.subr.bf16.mxu0 0
        %750 = vmatpush1.bf16.msra.mxu0 0
        %751 = vmatprep.mubr.bf16.mxu0 0
        %752 = vmatmul.mubr.bf16.gmra.mrb[0].mxu0 %v714
        %v753 = vpop.f32.mrb[0].mxu0
        %v754 = vadd.f32 0.0, %v753
        %v755 = vpop.f32.mrb[0].mxu0
        %v756 = vpop.f32.mrb[0].mxu0
        %v757 = vadd.f32 0.0, %v756
        %v758 = vpop.f32.mrb[0].mxu0
        %759 = vmatprep.mubr.bf16.mxu0 0
        %760 = vmatmul.mubr.bf16.gmra.mrb[0].mxu0 %v717
        %v761 = vpop.f32.mrb[0].mxu0
        %v762 = vadd.f32 0.0, %v761
        %v763 = vpop.f32.mrb[0].mxu0
        %v764 = vpop.f32.mrb[0].mxu0
        %v765 = vadd.f32 0.0, %v764
        %v766 = vpop.f32.mrb[0].mxu0
        %767 = vdwg.mxu0
        %v784 = vunpack.c.l.b16 %v684
        %v785 = vunpack.c.l.b16 %v685
        %v786 = vunpack.c.l.b16 %v686
        %v787 = vunpack.c.l.b16 %v687
        %v788 = vunpack.c.l.b16 %v688
        %v789 = vunpack.c.l.b16 %v689
        %v790 = vunpack.c.l.b16 %v690
        %v791 = vunpack.c.l.b16 %v691
        %v792 = vunpack.c.l.b16 %v692
        %v793 = vunpack.c.l.b16 %v693
        %v794 = vunpack.c.l.b16 %v694
        %v795 = vunpack.c.l.b16 %v695
        %v796 = vunpack.c.l.b16 %v696
        %v797 = vunpack.c.l.b16 %v697
        %v798 = vunpack.c.l.b16 %v698
        %v799 = vunpack.c.l.b16 %v699
        %v800 = vpack.c.b16 %v785, %v784
        %v801 = vpack.c.b16 %v787, %v786
        %v802 = vpack.c.b16 %v789, %v788
        %v803 = vpack.c.b16 %v791, %v790
        %v804 = vpack.c.b16 %v793, %v792
        %v805 = vpack.c.b16 %v795, %v794
        %v806 = vpack.c.b16 %v797, %v796
        %v807 = vpack.c.b16 %v799, %v798
        %816 = vmatprep.subr.bf16.mxu0 0
        %817 = vmatpush1.bf16.msra.mxu0 %v800
        %818 = vmatprep.subr.bf16.mxu0 0
        %819 = vmatpush1.bf16.msra.mxu0 %v801
        %820 = vmatprep.subr.bf16.mxu0 0
        %821 = vmatpush1.bf16.msra.mxu0 %v802
        %822 = vmatprep.subr.bf16.mxu0 0
        %823 = vmatpush1.bf16.msra.mxu0 %v803
        %824 = vmatprep.subr.bf16.mxu0 0
        %825 = vmatpush1.bf16.msra.mxu0 %v804
        %826 = vmatprep.subr.bf16.mxu0 0
        %827 = vmatpush1.bf16.msra.mxu0 %v805
        %828 = vmatprep.subr.bf16.mxu0 0
        %829 = vmatpush1.bf16.msra.mxu0 %v806
        %830 = vmatprep.subr.bf16.mxu0 0
        %831 = vmatpush1.bf16.msra.mxu0 %v807
        %832 = vmatprep.subr.bf16.mxu0 0
        %833 = vmatpush1.bf16.msra.mxu0 0
        %834 = vmatprep.subr.bf16.mxu0 0
        %835 = vmatpush1.bf16.msra.mxu0 0
        %836 = vmatprep.subr.bf16.mxu0 0
        %837 = vmatpush1.bf16.msra.mxu0 0
        %838 = vmatprep.subr.bf16.mxu0 0
        %839 = vmatpush1.bf16.msra.mxu0 0
        %840 = vmatprep.subr.bf16.mxu0 0
        %841 = vmatpush1.bf16.msra.mxu0 0
        %842 = vmatprep.subr.bf16.mxu0 0
        %843 = vmatpush1.bf16.msra.mxu0 0
        %844 = vmatprep.subr.bf16.mxu0 0
        %845 = vmatpush1.bf16.msra.mxu0 0
        %846 = vmatprep.subr.bf16.mxu0 0
        %847 = vmatpush1.bf16.msra.mxu0 0
        %848 = vmatprep.mubr.bf16.mxu0 0
        %849 = vmatmul.mubr.bf16.gmra.mrb[0].mxu0 %v700
        %v850 = vpop.f32.mrb[0].mxu0
        %v851 = vadd.f32 %v754, %v850
        %v852 = vpop.f32.mrb[0].mxu0
        %v853 = vpop.f32.mrb[0].mxu0
        %v854 = vadd.f32 %v757, %v853
        %v855 = vpop.f32.mrb[0].mxu0
        %856 = vmatprep.mubr.bf16.mxu0 0
        %857 = vmatmul.mubr.bf16.gmra.mrb[0].mxu0 %v701
        %v858 = vpop.f32.mrb[0].mxu0
        %v859 = vadd.f32 %v762, %v858
        %v860 = vpop.f32.mrb[0].mxu0
        %v861 = vpop.f32.mrb[0].mxu0
        %v862 = vadd.f32 %v765, %v861
        %v863 = vpop.f32.mrb[0].mxu0
        %864 = vdwg.mxu0
        %v865 = vld [vmem:[#allocation7 + $0x118] sm:$0x1]
        %v866 = vunpack.c.l.bf16 %v865
        %v867 = vlaneseq
        %v868 = vshrl.u32 %v867, 7
        %v869 = vsub.s32 0, %v868
        %v870 = vrot.slane %v866, %v869
        %v871 = vadd.f32 %v851, %v870
        %v872 = vadd.f32 %v854, %v870
        %v873 = vadd.f32 %v859, %v870
        %v874 = vadd.f32 %v862, %v870
        %v875 = vmul.f32 %v871, 0.1
        %v876 = vmul.f32 %v872, 0.1
        %v877 = vmul.f32 %v873, 0.1
        %v878 = vmul.f32 %v874, 0.1
        %v879 = vmax.f32 %v871, %v875
        %v880 = vmax.f32 %v872, %v876
        %v881 = vmax.f32 %v873, %v877
        %v882 = vmax.f32 %v874, %v878
        %v883 = vpack.c.bf16 %v880, %v879
        %v884 = vpack.c.bf16 %v882, %v881
        %v885 = vld [vmem:[#allocation8] sm:$0xff]
        %v886 = vld [vmem:[#allocation8 + $0x8] sm:$0xff]
        %v887 = vld [vmem:[#allocation8 + $0x10] sm:$0xff]
        %v888 = vld [vmem:[#allocation8 + $0x18] sm:$0xff]
        %v889 = vld [vmem:[#allocation8 + $0x20] sm:$0xff]
        %v890 = vld [vmem:[#allocation8 + $0x28] sm:$0xff]
        %v891 = vld [vmem:[#allocation8 + $0x30] sm:$0xff]
        %v892 = vld [vmem:[#allocation8 + $0x38] sm:$0xff]
        %v893 = vld [vmem:[#allocation8 + $0x40] sm:$0xff]
        %v894 = vld [vmem:[#allocation8 + $0x48] sm:$0xff]
        %v895 = vld [vmem:[#allocation8 + $0x50] sm:$0xff]
        %v896 = vld [vmem:[#allocation8 + $0x58] sm:$0xff]
        %v897 = vld [vmem:[#allocation8 + $0x60] sm:$0xff]
        %v898 = vld [vmem:[#allocation8 + $0x68] sm:$0xff]
        %v899 = vld [vmem:[#allocation8 + $0x70] sm:$0xff]
        %v900 = vld [vmem:[#allocation8 + $0x78] sm:$0xff]
        %v901 = vld [vmem:[#allocation8 + $0x80] sm:$0xff]
        %v902 = vld [vmem:[#allocation8 + $0x88] sm:$0xff]
        %v903 = vld [vmem:[#allocation8 + $0x90] sm:$0xff]
        %v904 = vld [vmem:[#allocation8 + $0x98] sm:$0xff]
        %v905 = vld [vmem:[#allocation8 + $0xa0] sm:$0xff]
        %v906 = vld [vmem:[#allocation8 + $0xa8] sm:$0xff]
        %v907 = vld [vmem:[#allocation8 + $0xb0] sm:$0xff]
        %v908 = vld [vmem:[#allocation8 + $0xb8] sm:$0xff]
        %v909 = vld [vmem:[#allocation8 + $0xc0] sm:$0xff]
        %v910 = vld [vmem:[#allocation8 + $0xc8] sm:$0xff]
        %v911 = vld [vmem:[#allocation8 + $0xd0] sm:$0xff]
        %v912 = vld [vmem:[#allocation8 + $0xd8] sm:$0xff]
        %v913 = vld [vmem:[#allocation8 + $0xe0] sm:$0xff]
        %v914 = vld [vmem:[#allocation8 + $0xe8] sm:$0xff]
        %v915 = vld [vmem:[#allocation8 + $0xf0] sm:$0xff]
        %v916 = vld [vmem:[#allocation8 + $0xf8] sm:$0xff]
        %v917 = vld [vmem:[#allocation8 + $0x100] sm:$0x11]
        %v918 = vld [vmem:[#allocation8 + $0x108] sm:$0x11]
        %v919 = vunpack.c.l.bf16 %v917
        %v920 = vunpack.c.h.bf16 %v917
        %v921 = vunpack.c.l.bf16 %v918
        %v922 = vunpack.c.h.bf16 %v918
        %v923 = vlaneseq
        %v924 = vshrl.u32 %v923, 7
        %v925 = vsub.s32 0, %v924
        %v926 = vrot.slane %v919, %v925
        %v927 = vlaneseq
        %v928 = vshrl.u32 %v927, 7
        %v929 = vsub.s32 0, %v928
        %v930 = vrot.slane %v920, %v929
        %v931 = vlaneseq
        %v932 = vshrl.u32 %v931, 7
        %v933 = vsub.s32 0, %v932
        %v934 = vrot.slane %v921, %v933
        %v935 = vlaneseq
        %v936 = vshrl.u32 %v935, 7
        %v937 = vsub.s32 0, %v936
        %v938 = vrot.slane %v922, %v937
        %v971 = vunpack.c.l.b16 %v885
        %v972 = vunpack.c.h.b16 %v885
        %v973 = vunpack.c.l.b16 %v886
        %v974 = vunpack.c.h.b16 %v886
        %v975 = vunpack.c.l.b16 %v887
        %v976 = vunpack.c.h.b16 %v887
        %v977 = vunpack.c.l.b16 %v888
        %v978 = vunpack.c.h.b16 %v888
        %v979 = vunpack.c.l.b16 %v889
        %v980 = vunpack.c.h.b16 %v889
        %v981 = vunpack.c.l.b16 %v890
        %v982 = vunpack.c.h.b16 %v890
        %v983 = vunpack.c.l.b16 %v891
        %v984 = vunpack.c.h.b16 %v891
        %v985 = vunpack.c.l.b16 %v892
        %v986 = vunpack.c.h.b16 %v892
        %v987 = vunpack.c.l.b16 %v893
        %v988 = vunpack.c.h.b16 %v893
        %v989 = vunpack.c.l.b16 %v894
        %v990 = vunpack.c.h.b16 %v894
        %v991 = vunpack.c.l.b16 %v895
        %v992 = vunpack.c.h.b16 %v895
        %v993 = vunpack.c.l.b16 %v896
        %v994 = vunpack.c.h.b16 %v896
        %v995 = vunpack.c.l.b16 %v897
        %v996 = vunpack.c.h.b16 %v897
        %v997 = vunpack.c.l.b16 %v898
        %v998 = vunpack.c.h.b16 %v898
        %v999 = vunpack.c.l.b16 %v899
        %v1000 = vunpack.c.h.b16 %v899
        %v1001 = vunpack.c.l.b16 %v900
        %v1002 = vunpack.c.h.b16 %v900
        %v1003 = vunpack.c.l.b16 %v901
        %v1004 = vunpack.c.h.b16 %v901
        %v1005 = vunpack.c.l.b16 %v902
        %v1006 = vunpack.c.h.b16 %v902
        %v1007 = vunpack.c.l.b16 %v903
        %v1008 = vunpack.c.h.b16 %v903
        %v1009 = vunpack.c.l.b16 %v904
        %v1010 = vunpack.c.h.b16 %v904
        %v1011 = vunpack.c.l.b16 %v905
        %v1012 = vunpack.c.h.b16 %v905
        %v1013 = vunpack.c.l.b16 %v906
        %v1014 = vunpack.c.h.b16 %v906
        %v1015 = vunpack.c.l.b16 %v907
        %v1016 = vunpack.c.h.b16 %v907
        %v1017 = vunpack.c.l.b16 %v908
        %v1018 = vunpack.c.h.b16 %v908
        %v1019 = vunpack.c.l.b16 %v909
        %v1020 = vunpack.c.h.b16 %v909
        %v1021 = vunpack.c.l.b16 %v910
        %v1022 = vunpack.c.h.b16 %v910
        %v1023 = vunpack.c.l.b16 %v911
        %v1024 = vunpack.c.h.b16 %v911
        %v1025 = vunpack.c.l.b16 %v912
        %v1026 = vunpack.c.h.b16 %v912
        %v1027 = vunpack.c.l.b16 %v913
        %v1028 = vunpack.c.h.b16 %v913
        %v1029 = vunpack.c.l.b16 %v914
        %v1030 = vunpack.c.h.b16 %v914
        %v1031 = vunpack.c.l.b16 %v915
        %v1032 = vunpack.c.h.b16 %v915
        %v1033 = vunpack.c.l.b16 %v916
        %v1034 = vunpack.c.h.b16 %v916
        %v1035 = vpack.c.b16 %v975, %v971
        %v1036 = vpack.c.b16 %v976, %v972
        %v1037 = vpack.c.b16 %v977, %v973
        %v1038 = vpack.c.b16 %v978, %v974
        %v1039 = vpack.c.b16 %v983, %v979
        %v1040 = vpack.c.b16 %v984, %v980
        %v1041 = vpack.c.b16 %v985, %v981
        %v1042 = vpack.c.b16 %v986, %v982
        %v1043 = vpack.c.b16 %v991, %v987
        %v1044 = vpack.c.b16 %v992, %v988
        %v1045 = vpack.c.b16 %v993, %v989
        %v1046 = vpack.c.b16 %v994, %v990
        %v1047 = vpack.c.b16 %v999, %v995
        %v1048 = vpack.c.b16 %v1000, %v996
        %v1049 = vpack.c.b16 %v1001, %v997
        %v1050 = vpack.c.b16 %v1002, %v998
        %v1051 = vpack.c.b16 %v1007, %v1003
        %v1052 = vpack.c.b16 %v1008, %v1004
        %v1053 = vpack.c.b16 %v1009, %v1005
        %v1054 = vpack.c.b16 %v1010, %v1006
        %v1055 = vpack.c.b16 %v1015, %v1011
        %v1056 = vpack.c.b16 %v1016, %v1012
        %v1057 = vpack.c.b16 %v1017, %v1013
        %v1058 = vpack.c.b16 %v1018, %v1014
        %v1059 = vpack.c.b16 %v1023, %v1019
        %v1060 = vpack.c.b16 %v1024, %v1020
        %v1061 = vpack.c.b16 %v1025, %v1021
        %v1062 = vpack.c.b16 %v1026, %v1022
        %v1063 = vpack.c.b16 %v1031, %v1027
        %v1064 = vpack.c.b16 %v1032, %v1028
        %v1065 = vpack.c.b16 %v1033, %v1029
        %v1066 = vpack.c.b16 %v1034, %v1030
        %1099 = vmatprep.subr.bf16.mxu0 %v1036
        %1100 = vmatpush1.bf16.msra.mxu0 %v1035
        %1101 = vmatprep.subr.bf16.mxu0 %v1040
        %1102 = vmatpush1.bf16.msra.mxu0 %v1039
        %1103 = vmatprep.subr.bf16.mxu0 %v1044
        %1104 = vmatpush1.bf16.msra.mxu0 %v1043
        %1105 = vmatprep.subr.bf16.mxu0 %v1048
        %1106 = vmatpush1.bf16.msra.mxu0 %v1047
        %1107 = vmatprep.subr.bf16.mxu0 %v1052
        %1108 = vmatpush1.bf16.msra.mxu0 %v1051
        %1109 = vmatprep.subr.bf16.mxu0 %v1056
        %1110 = vmatpush1.bf16.msra.mxu0 %v1055
        %1111 = vmatprep.subr.bf16.mxu0 %v1060
        %1112 = vmatpush1.bf16.msra.mxu0 %v1059
        %1113 = vmatprep.subr.bf16.mxu0 %v1064
        %1114 = vmatpush1.bf16.msra.mxu0 %v1063
        %1115 = vmatprep.subr.bf16.mxu0 0
        %1116 = vmatpush1.bf16.msra.mxu0 0
        %1117 = vmatprep.subr.bf16.mxu0 0
        %1118 = vmatpush1.bf16.msra.mxu0 0
        %1119 = vmatprep.subr.bf16.mxu0 0
        %1120 = vmatpush1.bf16.msra.mxu0 0
        %1121 = vmatprep.subr.bf16.mxu0 0
        %1122 = vmatpush1.bf16.msra.mxu0 0
        %1123 = vmatprep.subr.bf16.mxu0 0
        %1124 = vmatpush1.bf16.msra.mxu0 0
        %1125 = vmatprep.subr.bf16.mxu0 0
        %1126 = vmatpush1.bf16.msra.mxu0 0
        %1127 = vmatprep.subr.bf16.mxu0 0
        %1128 = vmatpush1.bf16.msra.mxu0 0
        %1129 = vmatprep.subr.bf16.mxu0 0
        %1130 = vmatpush1.bf16.msra.mxu0 0
        %1131 = vmatprep.mubr.bf16.mxu0 0
        %1132 = vmatmul.mubr.bf16.gmra.mrb[0].mxu0 %v883
        %v1133 = vpop.f32.mrb[0].mxu0
        %v1134 = vadd.f32 %v926, %v1133
        %v1135 = vpop.f32.mrb[0].mxu0
        %v1136 = vadd.f32 %v930, %v1135
        %v1137 = vpop.f32.mrb[0].mxu0
        %v1138 = vadd.f32 %v926, %v1137
        %v1139 = vpop.f32.mrb[0].mxu0
        %v1140 = vadd.f32 %v930, %v1139
        %1141 = vmatprep.mubr.bf16.mxu0 0
        %1142 = vmatmul.mubr.bf16.gmra.mrb[0].mxu0 %v884
        %v1143 = vpop.f32.mrb[0].mxu0
        %v1144 = vadd.f32 %v926, %v1143
        %v1145 = vpop.f32.mrb[0].mxu0
        %v1146 = vadd.f32 %v930, %v1145
        %v1147 = vpop.f32.mrb[0].mxu0
        %v1148 = vadd.f32 %v926, %v1147
        %v1149 = vpop.f32.mrb[0].mxu0
        %v1150 = vadd.f32 %v930, %v1149
        %1151 = vdwg.mxu0
        %1152 = vmatprep.subr.bf16.mxu0 %v1038
        %1153 = vmatpush1.bf16.msra.mxu0 %v1037
        %1154 = vmatprep.subr.bf16.mxu0 %v1042
        %1155 = vmatpush1.bf16.msra.mxu0 %v1041
        %1156 = vmatprep.subr.bf16.mxu0 %v1046
        %1157 = vmatpush1.bf16.msra.mxu0 %v1045
        %1158 = vmatprep.subr.bf16.mxu0 %v1050
        %1159 = vmatpush1.bf16.msra.mxu0 %v1049
        %1160 = vmatprep.subr.bf16.mxu0 %v1054
        %1161 = vmatpush1.bf16.msra.mxu0 %v1053
        %1162 = vmatprep.subr.bf16.mxu0 %v1058
        %1163 = vmatpush1.bf16.msra.mxu0 %v1057
        %1164 = vmatprep.subr.bf16.mxu0 %v1062
        %1165 = vmatpush1.bf16.msra.mxu0 %v1061
        %1166 = vmatprep.subr.bf16.mxu0 %v1066
        %1167 = vmatpush1.bf16.msra.mxu0 %v1065
        %1168 = vmatprep.subr.bf16.mxu0 0
        %1169 = vmatpush1.bf16.msra.mxu0 0
        %1170 = vmatprep.subr.bf16.mxu0 0
        %1171 = vmatpush1.bf16.msra.mxu0 0
        %1172 = vmatprep.subr.bf16.mxu0 0
        %1173 = vmatpush1.bf16.msra.mxu0 0
        %1174 = vmatprep.subr.bf16.mxu0 0
        %1175 = vmatpush1.bf16.msra.mxu0 0
        %1176 = vmatprep.subr.bf16.mxu0 0
        %1177 = vmatpush1.bf16.msra.mxu0 0
        %1178 = vmatprep.subr.bf16.mxu0 0
        %1179 = vmatpush1.bf16.msra.mxu0 0
        %1180 = vmatprep.subr.bf16.mxu0 0
        %1181 = vmatpush1.bf16.msra.mxu0 0
        %1182 = vmatprep.subr.bf16.mxu0 0
        %1183 = vmatpush1.bf16.msra.mxu0 0
        %1184 = vmatprep.mubr.bf16.mxu0 0
        %1185 = vmatmul.mubr.bf16.gmra.mrb[0].mxu0 %v883
        %v1186 = vpop.f32.mrb[0].mxu0
        %v1187 = vadd.f32 %v934, %v1186
        %v1188 = vpop.f32.mrb[0].mxu0
        %v1189 = vadd.f32 %v938, %v1188
        %v1190 = vpop.f32.mrb[0].mxu0
        %v1191 = vadd.f32 %v934, %v1190
        %v1192 = vpop.f32.mrb[0].mxu0
        %v1193 = vadd.f32 %v938, %v1192
        %1194 = vmatprep.mubr.bf16.mxu0 0
        %1195 = vmatmul.mubr.bf16.gmra.mrb[0].mxu0 %v884
        %v1196 = vpop.f32.mrb[0].mxu0
        %v1197 = vadd.f32 %v934, %v1196
        %v1198 = vpop.f32.mrb[0].mxu0
        %v1199 = vadd.f32 %v938, %v1198
        %v1200 = vpop.f32.mrb[0].mxu0
        %v1201 = vadd.f32 %v934, %v1200
        %v1202 = vpop.f32.mrb[0].mxu0
        %v1203 = vadd.f32 %v938, %v1202
        %1204 = vdwg.mxu0
        %v1205 = vmul.f32 %v1187, 0.5
        %v1206 = vmul.f32 %v1189, 0.5
        %v1207 = vmul.f32 %v1191, 0.5
        %v1208 = vmul.f32 %v1193, 0.5
        %v1209 = vmul.f32 %v1197, 0.5
        %v1210 = vmul.f32 %v1199, 0.5
        %v1211 = vmul.f32 %v1201, 0.5
        %v1212 = vmul.f32 %v1203, 0.5
        %v1213 = vmul.f32 %v1205, 1.442695
        %v1214 = vpow.pop %v1213
        %v1215 = vmul.f32 %v1206, 1.442695
        %v1216 = vpow.pop %v1215
        %v1217 = vmul.f32 %v1207, 1.442695
        %v1218 = vpow.pop %v1217
        %v1219 = vmul.f32 %v1208, 1.442695
        %v1220 = vpow.pop %v1219
        %v1221 = vmul.f32 %v1209, 1.442695
        %v1222 = vpow.pop %v1221
        %v1223 = vmul.f32 %v1210, 1.442695
        %v1224 = vpow.pop %v1223
        %v1225 = vmul.f32 %v1211, 1.442695
        %v1226 = vpow.pop %v1225
        %v1227 = vmul.f32 %v1212, 1.442695
        %v1228 = vpow.pop %v1227
        %v1229 = vmul.f32 %v352, %v1214
        %v1230 = vmul.f32 %v353, %v1216
        %v1231 = vmul.f32 %v354, %v1218
        %v1232 = vmul.f32 %v355, %v1220
        %v1233 = vmul.f32 %v356, %v1222
        %v1234 = vmul.f32 %v357, %v1224
        %v1235 = vmul.f32 %v358, %v1226
        %v1236 = vmul.f32 %v359, %v1228
        %v1237 = vadd.f32 %v1134, %v1229
        %v1238 = vadd.f32 %v1136, %v1230
        %v1239 = vadd.f32 %v1138, %v1231
        %v1240 = vadd.f32 %v1140, %v1232
        %v1241 = vadd.f32 %v1144, %v1233
        %v1242 = vadd.f32 %v1146, %v1234
        %v1243 = vadd.f32 %v1148, %v1235
        %v1244 = vadd.f32 %v1150, %v1236
        %v1245 = vld [vmem:[#allocation7 + $0x120] sm:$0xf]
        %v1246 = vld [vmem:[#allocation7 + $0x124] sm:$0xf]
        %v1247 = vld [vmem:[#allocation7 + $0x128] sm:$0xf]
        %v1248 = vld [vmem:[#allocation7 + $0x12c] sm:$0xf]
        %v1249 = vld [vmem:[#allocation7 + $0x130] sm:$0xf]
        %v1250 = vld [vmem:[#allocation7 + $0x134] sm:$0xf]
        %v1251 = vld [vmem:[#allocation7 + $0x138] sm:$0xf]
        %v1252 = vld [vmem:[#allocation7 + $0x13c] sm:$0xf]
        %v1253 = vld [vmem:[#allocation7 + $0x140] sm:$0xf]
        %v1254 = vld [vmem:[#allocation7 + $0x144] sm:$0xf]
        %v1255 = vld [vmem:[#allocation7 + $0x148] sm:$0xf]
        %v1256 = vld [vmem:[#allocation7 + $0x14c] sm:$0xf]
        %v1257 = vld [vmem:[#allocation7 + $0x150] sm:$0xf]
        %v1258 = vld [vmem:[#allocation7 + $0x154] sm:$0xf]
        %v1259 = vld [vmem:[#allocation7 + $0x158] sm:$0xf]
        %v1260 = vld [vmem:[#allocation7 + $0x15c] sm:$0xf]
        %v1261 = vld [vmem:[#allocation7 + $0x160] sm:$0xf]
        %v1262 = vld [vmem:[#allocation7 + $0x164] sm:$0xf]
        %v1263 = vld [vmem:[#allocation7 + $0x168] sm:$0xf]
        %v1264 = vld [vmem:[#allocation7 + $0x16c] sm:$0xf]
        %v1265 = vld [vmem:[#allocation7 + $0x170] sm:$0xf]
        %v1266 = vld [vmem:[#allocation7 + $0x174] sm:$0xf]
        %v1267 = vld [vmem:[#allocation7 + $0x178] sm:$0xf]
        %v1268 = vld [vmem:[#allocation7 + $0x17c] sm:$0xf]
        %v1269 = vld [vmem:[#allocation7 + $0x180] sm:$0xf]
        %v1270 = vld [vmem:[#allocation7 + $0x184] sm:$0xf]
        %v1271 = vld [vmem:[#allocation7 + $0x188] sm:$0xf]
        %v1272 = vld [vmem:[#allocation7 + $0x18c] sm:$0xf]
        %v1273 = vld [vmem:[#allocation7 + $0x190] sm:$0xf]
        %v1274 = vld [vmem:[#allocation7 + $0x194] sm:$0xf]
        %v1275 = vld [vmem:[#allocation7 + $0x198] sm:$0xf]
        %v1276 = vld [vmem:[#allocation7 + $0x19c] sm:$0xf]
        %v1277 = vld [vmem:[#allocation7 + $0x1a0] sm:$0xf]
        %v1278 = vld [vmem:[#allocation7 + $0x1a4] sm:$0xf]
        %v1279 = vld [vmem:[#allocation7 + $0x1a8] sm:$0xf]
        %v1280 = vld [vmem:[#allocation7 + $0x1ac] sm:$0xf]
        %v1281 = vld [vmem:[#allocation7 + $0x1b0] sm:$0xf]
        %v1282 = vld [vmem:[#allocation7 + $0x1b4] sm:$0xf]
        %v1283 = vld [vmem:[#allocation7 + $0x1b8] sm:$0xf]
        %v1284 = vld [vmem:[#allocation7 + $0x1bc] sm:$0xf]
        %v1285 = vld [vmem:[#allocation7 + $0x1c0] sm:$0xf]
        %v1286 = vld [vmem:[#allocation7 + $0x1c4] sm:$0xf]
        %v1287 = vld [vmem:[#allocation7 + $0x1c8] sm:$0xf]
        %v1288 = vld [vmem:[#allocation7 + $0x1cc] sm:$0xf]
        %v1289 = vld [vmem:[#allocation7 + $0x1d0] sm:$0xf]
        %v1290 = vld [vmem:[#allocation7 + $0x1d4] sm:$0xf]
        %v1291 = vld [vmem:[#allocation7 + $0x1d8] sm:$0xf]
        %v1292 = vld [vmem:[#allocation7 + $0x1dc] sm:$0xf]
        %v1293 = vpack.c.bf16 %v1239, %v1237
        %v1294 = vpack.c.bf16 %v1240, %v1238
        %v1295 = vpack.c.bf16 %v1243, %v1241
        %v1296 = vpack.c.bf16 %v1244, %v1242
        %v1329 = vunpack.c.l.b16 %v1261
        %v1330 = vunpack.c.l.b16 %v1262
        %v1331 = vunpack.c.l.b16 %v1263
        %v1332 = vunpack.c.l.b16 %v1264
        %v1333 = vunpack.c.l.b16 %v1265
        %v1334 = vunpack.c.l.b16 %v1266
        %v1335 = vunpack.c.l.b16 %v1267
        %v1336 = vunpack.c.l.b16 %v1268
        %v1337 = vunpack.c.l.b16 %v1269
        %v1338 = vunpack.c.l.b16 %v1270
        %v1339 = vunpack.c.l.b16 %v1271
        %v1340 = vunpack.c.l.b16 %v1272
        %v1341 = vunpack.c.l.b16 %v1273
        %v1342 = vunpack.c.l.b16 %v1274
        %v1343 = vunpack.c.l.b16 %v1275
        %v1344 = vunpack.c.l.b16 %v1276
        %v1345 = vunpack.c.l.b16 %v1277
        %v1346 = vunpack.c.l.b16 %v1278
        %v1347 = vunpack.c.l.b16 %v1279
        %v1348 = vunpack.c.l.b16 %v1280
        %v1349 = vunpack.c.l.b16 %v1281
        %v1350 = vunpack.c.l.b16 %v1282
        %v1351 = vunpack.c.l.b16 %v1283
        %v1352 = vunpack.c.l.b16 %v1284
        %v1353 = vunpack.c.l.b16 %v1285
        %v1354 = vunpack.c.l.b16 %v1286
        %v1355 = vunpack.c.l.b16 %v1287
        %v1356 = vunpack.c.l.b16 %v1288
        %v1357 = vunpack.c.l.b16 %v1289
        %v1358 = vunpack.c.l.b16 %v1290
        %v1359 = vunpack.c.l.b16 %v1291
        %v1360 = vunpack.c.l.b16 %v1292
        %v1361 = vpack.c.b16 %v1330, %v1329
        %v1362 = vpack.c.b16 %v1332, %v1331
        %v1363 = vpack.c.b16 %v1334, %v1333
        %v1364 = vpack.c.b16 %v1336, %v1335
        %v1365 = vpack.c.b16 %v1338, %v1337
        %v1366 = vpack.c.b16 %v1340, %v1339
        %v1367 = vpack.c.b16 %v1342, %v1341
        %v1368 = vpack.c.b16 %v1344, %v1343
        %v1369 = vpack.c.b16 %v1346, %v1345
        %v1370 = vpack.c.b16 %v1348, %v1347
        %v1371 = vpack.c.b16 %v1350, %v1349
        %v1372 = vpack.c.b16 %v1352, %v1351
        %v1373 = vpack.c.b16 %v1354, %v1353
        %v1374 = vpack.c.b16 %v1356, %v1355
        %v1375 = vpack.c.b16 %v1358, %v1357
        %v1376 = vpack.c.b16 %v1360, %v1359
        %1393 = vmatprep.subr.bf16.mxu0 0
        %1394 = vmatpush1.bf16.msra.mxu0 %v1361
        %1395 = vmatprep.subr.bf16.mxu0 0
        %1396 = vmatpush1.bf16.msra.mxu0 %v1362
        %1397 = vmatprep.subr.bf16.mxu0 0
        %1398 = vmatpush1.bf16.msra.mxu0 %v1363
        %1399 = vmatprep.subr.bf16.mxu0 0
        %1400 = vmatpush1.bf16.msra.mxu0 %v1364
        %1401 = vmatprep.subr.bf16.mxu0 0
        %1402 = vmatpush1.bf16.msra.mxu0 %v1365
        %1403 = vmatprep.subr.bf16.mxu0 0
        %1404 = vmatpush1.bf16.msra.mxu0 %v1366
        %1405 = vmatprep.subr.bf16.mxu0 0
        %1406 = vmatpush1.bf16.msra.mxu0 %v1367
        %1407 = vmatprep.subr.bf16.mxu0 0
        %1408 = vmatpush1.bf16.msra.mxu0 %v1368
        %1409 = vmatprep.subr.bf16.mxu0 0
        %1410 = vmatpush1.bf16.msra.mxu0 %v1369
        %1411 = vmatprep.subr.bf16.mxu0 0
        %1412 = vmatpush1.bf16.msra.mxu0 %v1370
        %1413 = vmatprep.subr.bf16.mxu0 0
        %1414 = vmatpush1.bf16.msra.mxu0 %v1371
        %1415 = vmatprep.subr.bf16.mxu0 0
        %1416 = vmatpush1.bf16.msra.mxu0 %v1372
        %1417 = vmatprep.subr.bf16.mxu0 0
        %1418 = vmatpush1.bf16.msra.mxu0 %v1373
        %1419 = vmatprep.subr.bf16.mxu0 0
        %1420 = vmatpush1.bf16.msra.mxu0 %v1374
        %1421 = vmatprep.subr.bf16.mxu0 0
        %1422 = vmatpush1.bf16.msra.mxu0 %v1375
        %1423 = vmatprep.subr.bf16.mxu0 0
        %1424 = vmatpush1.bf16.msra.mxu0 %v1376
        %1425 = vmatprep.mubr.bf16.mxu0 %v1294
        %1426 = vmatmul.mubr.bf16.gmra.mrb[0].mxu0 %v1293
        %v1427 = vpop.f32.mrb[0].mxu0
        %v1428 = vadd.f32 0.0, %v1427
        %v1429 = vpop.f32.mrb[0].mxu0
        %v1430 = vpop.f32.mrb[0].mxu0
        %v1431 = vadd.f32 0.0, %v1430
        %v1432 = vpop.f32.mrb[0].mxu0
        %1433 = vmatprep.mubr.bf16.mxu0 %v1296
        %1434 = vmatmul.mubr.bf16.gmra.mrb[0].mxu0 %v1295
        %v1435 = vpop.f32.mrb[0].mxu0
        %v1436 = vadd.f32 0.0, %v1435
        %v1437 = vpop.f32.mrb[0].mxu0
        %v1438 = vpop.f32.mrb[0].mxu0
        %v1439 = vadd.f32 0.0, %v1438
        %v1440 = vpop.f32.mrb[0].mxu0
        %1441 = vdwg.mxu0
        %v1458 = vunpack.c.l.b16 %v1245
        %v1459 = vunpack.c.l.b16 %v1246
        %v1460 = vunpack.c.l.b16 %v1247
        %v1461 = vunpack.c.l.b16 %v1248
        %v1462 = vunpack.c.l.b16 %v1249
        %v1463 = vunpack.c.l.b16 %v1250
        %v1464 = vunpack.c.l.b16 %v1251
        %v1465 = vunpack.c.l.b16 %v1252
        %v1466 = vunpack.c.l.b16 %v1253
        %v1467 = vunpack.c.l.b16 %v1254
        %v1468 = vunpack.c.l.b16 %v1255
        %v1469 = vunpack.c.l.b16 %v1256
        %v1470 = vunpack.c.l.b16 %v1257
        %v1471 = vunpack.c.l.b16 %v1258
        %v1472 = vunpack.c.l.b16 %v1259
        %v1473 = vunpack.c.l.b16 %v1260
        %v1474 = vpack.c.b16 %v1459, %v1458
        %v1475 = vpack.c.b16 %v1461, %v1460
        %v1476 = vpack.c.b16 %v1463, %v1462
        %v1477 = vpack.c.b16 %v1465, %v1464
        %v1478 = vpack.c.b16 %v1467, %v1466
        %v1479 = vpack.c.b16 %v1469, %v1468
        %v1480 = vpack.c.b16 %v1471, %v1470
        %v1481 = vpack.c.b16 %v1473, %v1472
        %1490 = vmatprep.subr.bf16.mxu0 0
        %1491 = vmatpush1.bf16.msra.mxu0 %v1474
        %1492 = vmatprep.subr.bf16.mxu0 0
        %1493 = vmatpush1.bf16.msra.mxu0 %v1475
        %1494 = vmatprep.subr.bf16.mxu0 0
        %1495 = vmatpush1.bf16.msra.mxu0 %v1476
        %1496 = vmatprep.subr.bf16.mxu0 0
        %1497 = vmatpush1.bf16.msra.mxu0 %v1477
        %1498 = vmatprep.subr.bf16.mxu0 0
        %1499 = vmatpush1.bf16.msra.mxu0 %v1478
        %1500 = vmatprep.subr.bf16.mxu0 0
        %1501 = vmatpush1.bf16.msra.mxu0 %v1479
        %1502 = vmatprep.subr.bf16.mxu0 0
        %1503 = vmatpush1.bf16.msra.mxu0 %v1480
        %1504 = vmatprep.subr.bf16.mxu0 0
        %1505 = vmatpush1.bf16.msra.mxu0 %v1481
        %1506 = vmatprep.subr.bf16.mxu0 0
        %1507 = vmatpush1.bf16.msra.mxu0 0
        %1508 = vmatprep.subr.bf16.mxu0 0
        %1509 = vmatpush1.bf16.msra.mxu0 0
        %1510 = vmatprep.subr.bf16.mxu0 0
        %1511 = vmatpush1.bf16.msra.mxu0 0
        %1512 = vmatprep.subr.bf16.mxu0 0
        %1513 = vmatpush1.bf16.msra.mxu0 0
        %1514 = vmatprep.subr.bf16.mxu0 0
        %1515 = vmatpush1.bf16.msra.mxu0 0
        %1516 = vmatprep.subr.bf16.mxu0 0
        %1517 = vmatpush1.bf16.msra.mxu0 0
        %1518 = vmatprep.subr.bf16.mxu0 0
        %1519 = vmatpush1.bf16.msra.mxu0 0
        %1520 = vmatprep.subr.bf16.mxu0 0
        %1521 = vmatpush1.bf16.msra.mxu0 0
        %1522 = vmatprep.mubr.bf16.mxu0 0
        %1523 = vmatmul.mubr.bf16.gmra.mrb[0].mxu0 %v700
        %v1524 = vpop.f32.mrb[0].mxu0
        %v1525 = vadd.f32 %v1428, %v1524
        %v1526 = vpop.f32.mrb[0].mxu0
        %v1527 = vpop.f32.mrb[0].mxu0
        %v1528 = vadd.f32 %v1431, %v1527
        %v1529 = vpop.f32.mrb[0].mxu0
        %1530 = vmatprep.mubr.bf16.mxu0 0
        %1531 = vmatmul.mubr.bf16.gmra.mrb[0].mxu0 %v701
        %v1532 = vpop.f32.mrb[0].mxu0
        %v1533 = vadd.f32 %v1436, %v1532
        %v1534 = vpop.f32.mrb[0].mxu0
        %v1535 = vpop.f32.mrb[0].mxu0
        %v1536 = vadd.f32 %v1439, %v1535
        %v1537 = vpop.f32.mrb[0].mxu0
        %1538 = vdwg.mxu0
        %v1539 = vld [vmem:[#allocation7 + $0x1e0] sm:$0x1]
        %v1540 = vunpack.c.l.bf16 %v1539
        %v1541 = vlaneseq
        %v1542 = vshrl.u32 %v1541, 7
        %v1543 = vsub.s32 0, %v1542
        %v1544 = vrot.slane %v1540, %v1543
        %v1545 = vadd.f32 %v1525, %v1544
        %v1546 = vadd.f32 %v1528, %v1544
        %v1547 = vadd.f32 %v1533, %v1544
        %v1548 = vadd.f32 %v1536, %v1544
        %v1549 = vmul.f32 %v1545, 0.1
        %v1550 = vmul.f32 %v1546, 0.1
        %v1551 = vmul.f32 %v1547, 0.1
        %v1552 = vmul.f32 %v1548, 0.1
        %v1553 = vmax.f32 %v1545, %v1549
        %v1554 = vmax.f32 %v1546, %v1550
        %v1555 = vmax.f32 %v1547, %v1551
        %v1556 = vmax.f32 %v1548, %v1552
        %v1557 = vld [vmem:[#allocation7 + $0x1e8] sm:$0xf]
        %v1558 = vld [vmem:[#allocation7 + $0x1ec] sm:$0xf]
        %v1559 = vld [vmem:[#allocation7 + $0x1f0] sm:$0xf]
        %v1560 = vld [vmem:[#allocation7 + $0x1f4] sm:$0xf]
        %v1561 = vld [vmem:[#allocation7 + $0x1f8] sm:$0xf]
        %v1562 = vld [vmem:[#allocation7 + $0x1fc] sm:$0xf]
        %v1563 = vld [vmem:[#allocation7 + $0x200] sm:$0xf]
        %v1564 = vld [vmem:[#allocation7 + $0x204] sm:$0xf]
        %v1565 = vld [vmem:[#allocation7 + $0x208] sm:$0xf]
        %v1566 = vld [vmem:[#allocation7 + $0x20c] sm:$0xf]
        %v1567 = vld [vmem:[#allocation7 + $0x210] sm:$0xf]
        %v1568 = vld [vmem:[#allocation7 + $0x214] sm:$0xf]
        %v1569 = vld [vmem:[#allocation7 + $0x218] sm:$0xf]
        %v1570 = vld [vmem:[#allocation7 + $0x21c] sm:$0xf]
        %v1571 = vld [vmem:[#allocation7 + $0x220] sm:$0xf]
        %v1572 = vld [vmem:[#allocation7 + $0x224] sm:$0xf]
        %v1573 = vpack.c.bf16 %v1554, %v1553
        %v1574 = vpack.c.bf16 %v1556, %v1555
        %v1575 = vld [vmem:[#allocation7 + $0x228] sm:$0x1]
        %v1576 = vunpack.c.l.bf16 %v1575
        %v1577 = vlaneseq
        %v1578 = vshrl.u32 %v1577, 7
        %v1579 = vsub.s32 0, %v1578
        %v1580 = vrot.slane %v1576, %v1579
        %v1597 = vunpack.c.l.b16 %v1557
        %v1598 = vunpack.c.l.b16 %v1558
        %v1599 = vunpack.c.l.b16 %v1559
        %v1600 = vunpack.c.l.b16 %v1560
        %v1601 = vunpack.c.l.b16 %v1561
        %v1602 = vunpack.c.l.b16 %v1562
        %v1603 = vunpack.c.l.b16 %v1563
        %v1604 = vunpack.c.l.b16 %v1564
        %v1605 = vunpack.c.l.b16 %v1565
        %v1606 = vunpack.c.l.b16 %v1566
        %v1607 = vunpack.c.l.b16 %v1567
        %v1608 = vunpack.c.l.b16 %v1568
        %v1609 = vunpack.c.l.b16 %v1569
        %v1610 = vunpack.c.l.b16 %v1570
        %v1611 = vunpack.c.l.b16 %v1571
        %v1612 = vunpack.c.l.b16 %v1572
        %v1613 = vpack.c.b16 %v1598, %v1597
        %v1614 = vpack.c.b16 %v1600, %v1599
        %v1615 = vpack.c.b16 %v1602, %v1601
        %v1616 = vpack.c.b16 %v1604, %v1603
        %v1617 = vpack.c.b16 %v1606, %v1605
        %v1618 = vpack.c.b16 %v1608, %v1607
        %v1619 = vpack.c.b16 %v1610, %v1609
        %v1620 = vpack.c.b16 %v1612, %v1611
        %1629 = vmatprep.subr.bf16.mxu0 0
        %1630 = vmatpush1.bf16.msra.mxu0 %v1613
        %1631 = vmatprep.subr.bf16.mxu0 0
        %1632 = vmatpush1.bf16.msra.mxu0 %v1614
        %1633 = vmatprep.subr.bf16.mxu0 0
        %1634 = vmatpush1.bf16.msra.mxu0 %v1615
        %1635 = vmatprep.subr.bf16.mxu0 0
        %1636 = vmatpush1.bf16.msra.mxu0 %v1616
        %1637 = vmatprep.subr.bf16.mxu0 0
        %1638 = vmatpush1.bf16.msra.mxu0 %v1617
        %1639 = vmatprep.subr.bf16.mxu0 0
        %1640 = vmatpush1.bf16.msra.mxu0 %v1618
        %1641 = vmatprep.subr.bf16.mxu0 0
        %1642 = vmatpush1.bf16.msra.mxu0 %v1619
        %1643 = vmatprep.subr.bf16.mxu0 0
        %1644 = vmatpush1.bf16.msra.mxu0 %v1620
        %1645 = vmatprep.subr.bf16.mxu0 0
        %1646 = vmatpush1.bf16.msra.mxu0 0
        %1647 = vmatprep.subr.bf16.mxu0 0
        %1648 = vmatpush1.bf16.msra.mxu0 0
        %1649 = vmatprep.subr.bf16.mxu0 0
        %1650 = vmatpush1.bf16.msra.mxu0 0
        %1651 = vmatprep.subr.bf16.mxu0 0
        %1652 = vmatpush1.bf16.msra.mxu0 0
        %1653 = vmatprep.subr.bf16.mxu0 0
        %1654 = vmatpush1.bf16.msra.mxu0 0
        %1655 = vmatprep.subr.bf16.mxu0 0
        %1656 = vmatpush1.bf16.msra.mxu0 0
        %1657 = vmatprep.subr.bf16.mxu0 0
        %1658 = vmatpush1.bf16.msra.mxu0 0
        %1659 = vmatprep.subr.bf16.mxu0 0
        %1660 = vmatpush1.bf16.msra.mxu0 0
        %1661 = vmatprep.mubr.bf16.mxu0 0
        %1662 = vmatmul.mubr.bf16.gmra.mrb[0].mxu0 %v1573
        %v1663 = vpop.f32.mrb[0].mxu0
        %v1664 = vadd.f32 %v1580, %v1663
        %v1665 = vpop.f32.mrb[0].mxu0
        %v1666 = vpop.f32.mrb[0].mxu0
        %v1667 = vadd.f32 %v1580, %v1666
        %v1668 = vpop.f32.mrb[0].mxu0
        %1669 = vmatprep.mubr.bf16.mxu0 0
        %1670 = vmatmul.mubr.bf16.gmra.mrb[0].mxu0 %v1574
        %v1671 = vpop.f32.mrb[0].mxu0
        %v1672 = vadd.f32 %v1580, %v1671
        %v1673 = vpop.f32.mrb[0].mxu0
        %v1674 = vpop.f32.mrb[0].mxu0
        %v1675 = vadd.f32 %v1580, %v1674
        %v1676 = vpop.f32.mrb[0].mxu0
        %1677 = vdwg.mxu0
        %v1678 = vmul.f32 %v1664, 0.1
        %v1679 = vmul.f32 %v1667, 0.1
        %v1680 = vmul.f32 %v1672, 0.1
        %v1681 = vmul.f32 %v1675, 0.1
        %v1682 = vmax.f32 %v1664, %v1678
        %v1683 = vmax.f32 %v1667, %v1679
        %v1684 = vmax.f32 %v1672, %v1680
        %v1685 = vmax.f32 %v1675, %v1681
        %v1686 = vld [vmem:[#allocation7 + $0x230] sm:$0xf]
        %v1687 = vld [vmem:[#allocation7 + $0x234] sm:$0xf]
        %v1688 = vld [vmem:[#allocation7 + $0x238] sm:$0xf]
        %v1689 = vld [vmem:[#allocation7 + $0x23c] sm:$0xf]
        %v1690 = vld [vmem:[#allocation7 + $0x240] sm:$0xf]
        %v1691 = vld [vmem:[#allocation7 + $0x244] sm:$0xf]
        %v1692 = vld [vmem:[#allocation7 + $0x248] sm:$0xf]
        %v1693 = vld [vmem:[#allocation7 + $0x24c] sm:$0xf]
        %v1694 = vld [vmem:[#allocation7 + $0x250] sm:$0xf]
        %v1695 = vld [vmem:[#allocation7 + $0x254] sm:$0xf]
        %v1696 = vld [vmem:[#allocation7 + $0x258] sm:$0xf]
        %v1697 = vld [vmem:[#allocation7 + $0x25c] sm:$0xf]
        %v1698 = vld [vmem:[#allocation7 + $0x260] sm:$0xf]
        %v1699 = vld [vmem:[#allocation7 + $0x264] sm:$0xf]
        %v1700 = vld [vmem:[#allocation7 + $0x268] sm:$0xf]
        %v1701 = vld [vmem:[#allocation7 + $0x26c] sm:$0xf]
        %v1702 = vpack.c.bf16 %v1683, %v1682
        %v1703 = vpack.c.bf16 %v1685, %v1684
        %v1704 = vld [vmem:[#allocation7 + $0x270] sm:$0x1]
        %v1705 = vunpack.c.l.bf16 %v1704
        %v1706 = vlaneseq
        %v1707 = vshrl.u32 %v1706, 7
        %v1708 = vsub.s32 0, %v1707
        %v1709 = vrot.slane %v1705, %v1708
        %v1726 = vunpack.c.l.b16 %v1686
        %v1727 = vunpack.c.l.b16 %v1687
        %v1728 = vunpack.c.l.b16 %v1688
        %v1729 = vunpack.c.l.b16 %v1689
        %v1730 = vunpack.c.l.b16 %v1690
        %v1731 = vunpack.c.l.b16 %v1691
        %v1732 = vunpack.c.l.b16 %v1692
        %v1733 = vunpack.c.l.b16 %v1693
        %v1734 = vunpack.c.l.b16 %v1694
        %v1735 = vunpack.c.l.b16 %v1695
        %v1736 = vunpack.c.l.b16 %v1696
        %v1737 = vunpack.c.l.b16 %v1697
        %v1738 = vunpack.c.l.b16 %v1698
        %v1739 = vunpack.c.l.b16 %v1699
        %v1740 = vunpack.c.l.b16 %v1700
        %v1741 = vunpack.c.l.b16 %v1701
        %v1742 = vpack.c.b16 %v1727, %v1726
        %v1743 = vpack.c.b16 %v1729, %v1728
        %v1744 = vpack.c.b16 %v1731, %v1730
        %v1745 = vpack.c.b16 %v1733, %v1732
        %v1746 = vpack.c.b16 %v1735, %v1734
        %v1747 = vpack.c.b16 %v1737, %v1736
        %v1748 = vpack.c.b16 %v1739, %v1738
        %v1749 = vpack.c.b16 %v1741, %v1740
        %1758 = vmatprep.subr.bf16.mxu0 0
        %1759 = vmatpush1.bf16.msra.mxu0 %v1742
        %1760 = vmatprep.subr.bf16.mxu0 0
        %1761 = vmatpush1.bf16.msra.mxu0 %v1743
        %1762 = vmatprep.subr.bf16.mxu0 0
        %1763 = vmatpush1.bf16.msra.mxu0 %v1744
        %1764 = vmatprep.subr.bf16.mxu0 0
        %1765 = vmatpush1.bf16.msra.mxu0 %v1745
        %1766 = vmatprep.subr.bf16.mxu0 0
        %1767 = vmatpush1.bf16.msra.mxu0 %v1746
        %1768 = vmatprep.subr.bf16.mxu0 0
        %1769 = vmatpush1.bf16.msra.mxu0 %v1747
        %1770 = vmatprep.subr.bf16.mxu0 0
        %1771 = vmatpush1.bf16.msra.mxu0 %v1748
        %1772 = vmatprep.subr.bf16.mxu0 0
        %1773 = vmatpush1.bf16.msra.mxu0 %v1749
        %1774 = vmatprep.subr.bf16.mxu0 0
        %1775 = vmatpush1.bf16.msra.mxu0 0
        %1776 = vmatprep.subr.bf16.mxu0 0
        %1777 = vmatpush1.bf16.msra.mxu0 0
        %1778 = vmatprep.subr.bf16.mxu0 0
        %1779 = vmatpush1.bf16.msra.mxu0 0
        %1780 = vmatprep.subr.bf16.mxu0 0
        %1781 = vmatpush1.bf16.msra.mxu0 0
        %1782 = vmatprep.subr.bf16.mxu0 0
        %1783 = vmatpush1.bf16.msra.mxu0 0
        %1784 = vmatprep.subr.bf16.mxu0 0
        %1785 = vmatpush1.bf16.msra.mxu0 0
        %1786 = vmatprep.subr.bf16.mxu0 0
        %1787 = vmatpush1.bf16.msra.mxu0 0
        %1788 = vmatprep.subr.bf16.mxu0 0
        %1789 = vmatpush1.bf16.msra.mxu0 0
        %1790 = vmatprep.mubr.bf16.mxu0 0
        %1791 = vmatmul.mubr.bf16.gmra.mrb[0].mxu0 %v1702
        %v1792 = vpop.f32.mrb[0].mxu0
        %v1793 = vadd.f32 %v1709, %v1792
        %v1794 = vpop.f32.mrb[0].mxu0
        %v1795 = vpop.f32.mrb[0].mxu0
        %v1796 = vadd.f32 %v1709, %v1795
        %v1797 = vpop.f32.mrb[0].mxu0
        %1798 = vmatprep.mubr.bf16.mxu0 0
        %1799 = vmatmul.mubr.bf16.gmra.mrb[0].mxu0 %v1703
        %v1800 = vpop.f32.mrb[0].mxu0
        %v1801 = vadd.f32 %v1709, %v1800
        %v1802 = vpop.f32.mrb[0].mxu0
        %v1803 = vpop.f32.mrb[0].mxu0
        %v1804 = vadd.f32 %v1709, %v1803
        %v1805 = vpop.f32.mrb[0].mxu0
        %1806 = vdwg.mxu0
        %v1807 = vadd.f32 %v1187, 1.0
        %v1808 = vadd.f32 %v1189, 1.0
        %v1809 = vadd.f32 %v1191, 1.0
        %v1810 = vadd.f32 %v1193, 1.0
        %v1811 = vadd.f32 %v1197, 1.0
        %v1812 = vadd.f32 %v1199, 1.0
        %v1813 = vadd.f32 %v1201, 1.0
        %v1814 = vadd.f32 %v1203, 1.0
        %v1815 = vmul.f32 %v1134, %v1134
        %v1816 = vmul.f32 %v1136, %v1136
        %v1817 = vmul.f32 %v1138, %v1138
        %v1818 = vmul.f32 %v1140, %v1140
        %v1819 = vmul.f32 %v1144, %v1144
        %v1820 = vmul.f32 %v1146, %v1146
        %v1821 = vmul.f32 %v1148, %v1148
        %v1822 = vmul.f32 %v1150, %v1150
        %v1823 = vsub.f32 %v1807, %v1815
        %v1824 = vsub.f32 %v1808, %v1816
        %v1825 = vsub.f32 %v1809, %v1817
        %v1826 = vsub.f32 %v1810, %v1818
        %v1827 = vsub.f32 %v1811, %v1819
        %v1828 = vsub.f32 %v1812, %v1820
        %v1829 = vsub.f32 %v1813, %v1821
        %v1830 = vsub.f32 %v1814, %v1822
        %v1831 = vmul.f32 %v1187, 1.442695
        %v1832 = vpow.pop %v1831
        %v1833 = vmul.f32 %v1189, 1.442695
        %v1834 = vpow.pop %v1833
        %v1835 = vmul.f32 %v1191, 1.442695
        %v1836 = vpow.pop %v1835
        %v1837 = vmul.f32 %v1193, 1.442695
        %v1838 = vpow.pop %v1837
        %v1839 = vmul.f32 %v1197, 1.442695
        %v1840 = vpow.pop %v1839
        %v1841 = vmul.f32 %v1199, 1.442695
        %v1842 = vpow.pop %v1841
        %v1843 = vmul.f32 %v1201, 1.442695
        %v1844 = vpow.pop %v1843
        %v1845 = vmul.f32 %v1203, 1.442695
        %v1846 = vpow.pop %v1845
        %v1847 = vsub.f32 %v1823, %v1832
        %v1848 = vsub.f32 %v1824, %v1834
        %v1849 = vsub.f32 %v1825, %v1836
        %v1850 = vsub.f32 %v1826, %v1838
        %v1851 = vsub.f32 %v1827, %v1840
        %v1852 = vsub.f32 %v1828, %v1842
        %v1853 = vsub.f32 %v1829, %v1844
        %v1854 = vsub.f32 %v1830, %v1846
        %v1855 = vmul.f32 %v1847, -0.5
        %v1856 = vmul.f32 %v1848, -0.5
        %v1857 = vmul.f32 %v1849, -0.5
        %v1858 = vmul.f32 %v1850, -0.5
        %v1859 = vmul.f32 %v1851, -0.5
        %v1860 = vmul.f32 %v1852, -0.5
        %v1861 = vmul.f32 %v1853, -0.5
        %v1862 = vmul.f32 %v1854, -0.5
        %v1863 = vadd.f32 %v1855, %v1856
        %1864 = vadd.xlane.f32.xlu0 %v1863
        %v1865 = vpop.xlane.xlu0 %1864
        %v1866 = vadd.f32 %v1857, %v1858
        %1867 = vadd.xlane.f32.xlu0 %v1866
        %v1868 = vpop.xlane.xlu0 %1867
        %v1869 = vadd.f32 %v1859, %v1860
        %1870 = vadd.xlane.f32.xlu0 %v1869
        %v1871 = vpop.xlane.xlu0 %1870
        %v1872 = vadd.f32 %v1861, %v1862
        %1873 = vadd.xlane.f32.xlu0 %v1872
        %v1874 = vpop.xlane.xlu0 %1873
        %v1875 = vrcp.pop 256.0
        %v1876 = vmul.f32 %v1865, %v1875
        %v1877 = vmul.f32 %v1868, %v1875
        %v1878 = vmul.f32 %v1871, %v1875
        %v1879 = vmul.f32 %v1874, %v1875
        %1880 = vst [vmem:[%s329] sm:$0xff] %v1134
        %1881 = vst [vmem:[%s329 + $0x8] sm:$0xff] %v1136
        %1882 = vst [vmem:[%s329 + $0x38] sm:$0xff] %v1138
        %1883 = vst [vmem:[%s329 + $0x40] sm:$0xff] %v1140
        %1884 = vst [vmem:[%s329 + $0x70] sm:$0xff] %v1144
        %1885 = vst [vmem:[%s329 + $0x78] sm:$0xff] %v1146
        %1886 = vst [vmem:[%s329 + $0xa8] sm:$0xff] %v1148
        %1887 = vst [vmem:[%s329 + $0xb0] sm:$0xff] %v1150
        %1888 = vst [vmem:[%s329 + $0x10] sm:$0xff] %v1187
        %1889 = vst [vmem:[%s329 + $0x18] sm:$0xff] %v1189
        %1890 = vst [vmem:[%s329 + $0x48] sm:$0xff] %v1191
        %1891 = vst [vmem:[%s329 + $0x50] sm:$0xff] %v1193
        %1892 = vst [vmem:[%s329 + $0x80] sm:$0xff] %v1197
        %1893 = vst [vmem:[%s329 + $0x88] sm:$0xff] %v1199
        %1894 = vst [vmem:[%s329 + $0xb8] sm:$0xff] %v1201
        %1895 = vst [vmem:[%s329 + $0xc0] sm:$0xff] %v1203
        %1896 = vst [vmem:[%s329 + $0x20] sm:$0xff] %v1237
        %1897 = vst [vmem:[%s329 + $0x28] sm:$0xff] %v1238
        %1898 = vst [vmem:[%s329 + $0x58] sm:$0xff] %v1239
        %1899 = vst [vmem:[%s329 + $0x60] sm:$0xff] %v1240
        %1900 = vst [vmem:[%s329 + $0x90] sm:$0xff] %v1241
        %1901 = vst [vmem:[%s329 + $0x98] sm:$0xff] %v1242
        %1902 = vst [vmem:[%s329 + $0xc8] sm:$0xff] %v1243
        %1903 = vst [vmem:[%s329 + $0xd0] sm:$0xff] %v1244
        %1904 = vst [vmem:[%s329 + $0x30] sm:$0xff] %v1793
        %1905 = vst [vmem:[%s329 + $0x68] sm:$0xff] %v1796
        %1906 = vst [vmem:[%s329 + $0xa0] sm:$0xff] %v1801
        %1907 = vst [vmem:[%s329 + $0xd8] sm:$0xff] %v1804
        %vm1908 = vcmask 89168
        %1909 = vst.msk [vmem:[%s329 + $0x30] sm:$0xff] %vm1908, %v1876
        %1910 = vst.msk [vmem:[%s329 + $0x68] sm:$0xff] %vm1908, %v1877
        %1911 = vst.msk [vmem:[%s329 + $0xa0] sm:$0xff] %vm1908, %v1878
        %1912 = vst.msk [vmem:[%s329 + $0xd8] sm:$0xff] %vm1908, %v1879
        %s1913 = sand.u32 %s154, 1
        %s1914 = scalar_lea.sflag [#allocation4], %s1913
        %s1915 = sand.u32 %s154, 1
        %s1916 = smul.addr %s1915, 224
        %s1917 = scalar_lea.vmem [#allocation10], %s1916
        // Predicated region
        $region57: #{tpu_custom_call.1} parent=39 // pred_check
          %p1918 = pneg %p164
        $region58: #{tpu_custom_call.1} parent=39 // pred_check_branch
          %1920 = sbr.rel (%p1918) target = $region60
        $region59: #{tpu_custom_call.1} parent=39 // pred_region
          %s1921 = smul.u32 4, %s26
          %s1923 = ssub.s32 3584, 3584
          %1924 = vsyncadd %s1914, %s1923
          %s1925 = smul.addr %s1921, 7
          %s1926 = smul.addr %s1925, 128
          %s1927 = scalar_lea.hbm %s5, %s1926
          %s1928 = sshll.u32 %s1917, 4
          %s1929 = int_to_ptr.vmem [resolvable:$true] %s1928
          %1934 = dma.vmem_to_hbm [thread:$0]  %s1929, 3584, %s1927, %s1914, 896, 896, 56
        $region60: #{tpu_custom_call.1} parent=39 // pred_fallthru
          _
      $region40: #{tpu_custom_call.1} parent=5 // pred_fallthru
        _
      %p1935 = scmp.le.s32.totalorder 2, %s21
      // Predicated region
      $region61: #{tpu_custom_call.1} parent=5 // pred_check
        %p1936 = pneg %p1935
      $region62: #{tpu_custom_call.1} parent=5 // pred_check_branch
        %1938 = sbr.rel (%p1936) target = $region64
      $region63: #{tpu_custom_call.1} parent=5 // pred_region
        %s1939 = ssub.s32 %s21, 2
        // Predicated region
        $region65: #{tpu_custom_call.1} parent=63 // pred_check
          %p1940 = pneg %p170
        $region66: #{tpu_custom_call.1} parent=63 // pred_check_branch
          %1942 = sbr.rel (%p1940) target = $region68
        $region67: #{tpu_custom_call.1} parent=63 // pred_region
          %s1943 = sand.u32 %s155, 1
          %s1944 = scalar_lea.sflag [#allocation4], %s1943
          %s1945 = sand.u32 %s155, 1
          %s1946 = smul.addr %s1945, 224
          %s1947 = scalar_lea.vmem [#allocation10], %s1946
          %1948 = dma.done %s1944, 3584
        $region68: #{tpu_custom_call.1} parent=63 // pred_fallthru
          _
      $region64: #{tpu_custom_call.1} parent=5 // pred_fallthru
        _
    $region6: #{tpu_custom_call.1} parent=1 // loop_footer
      %s25 = sadd.s32 1, %s21
    $region7: #{tpu_custom_call.1} parent=1 // loop_footer_branch
      %20 = sbr.rel target = $region3
    $region8: #{tpu_custom_call.1} parent=1 // loop_exit
      _
    %1949 = vsyncpa [#allocation3], 1
    %s1950 = scalar_lea.sflag [#allocation3], 1
    %1951 = vsyncpa %s1950, 1
    %1952 = vsyncpa [#allocation6], 1
    %s1953 = scalar_lea.sflag [#allocation6], 1
    %1954 = vsyncpa %s1953, 1
    %1955 = vsyncpa [#allocation9], 1
    %1956 = vsyncpa [#allocation4], 1
    %s1957 = scalar_lea.sflag [#allocation4], 1
    %1958 = vsyncpa %s1957, 1

</llo_original>
